<compile_context>
chip_gen: v5e
topology: v5e:2x2
jax: 0.10.0
libtpu: 0.0.40
codegen_flags: <defaults>
</compile_context>

<pallas_src>
import functools
import math

import jax
import jax.numpy as jnp
from jax.experimental import pallas as pl
from jax.experimental.pallas import tpu as pltpu

_LN2 = math.log(2.0)


def _neg_log_sigmoid(x):
    # -log(sigmoid(x)) = softplus(-x) = max(-x, 0) + log1p(exp(-|x|))
    return jnp.maximum(-x, 0.0) + jnp.log1p(jnp.exp(-jnp.abs(x)))


def skipgram_aux_kernel(scales_ref, u_ref, v_ref, neg_ref, gaug_ref, wT_ref,
                        aug_ref, mask_ref, out_ref, *, TB, N, A_pad, A_real):
    g = pl.program_id(1)          # batch-tile axis (carries the accumulator)

    @pl.when(g == 0)
    def _init():
        out_ref[...] = jnp.zeros_like(out_ref)

    # streamed bf16 embedding tiles (ones lane at column D of the D padding)
    u = u_ref[...].astype(jnp.float32)                         # (TB, D_pad)
    v = v_ref[...].astype(jnp.float32)                         # (TB, D_pad)

    # --- skip-gram scores in D-space -------------------------------------
    # uG_aug lane j<D  = (u W^T W)[j] + (W^T b)[j];  lane D = u·W^T b + b·b
    uG = jnp.dot(u, gaug_ref[...], preferred_element_type=jnp.float32)  # (TB, D_pad)

    pos_logit = jnp.sum(uG * v, axis=-1, keepdims=True)        # == enc(u)·enc(v)
    pos_logit = jnp.clip(pos_logit, -10.0, 10.0)
    score = _neg_log_sigmoid(pos_logit)                        # (TB, 1)

    neg_score = jnp.zeros((TB, 1), jnp.float32)
    for n in range(N):  # static unroll; only one (TB, D_pad) slice live per step
        neg_n = neg_ref[pl.ds(n * TB, TB), :].astype(jnp.float32)
        logit_n = jnp.sum(uG * neg_n, axis=-1, keepdims=True)  # == enc(neg)·enc(u)
        logit_n = jnp.clip(logit_n, -10.0, 10.0)
        neg_score = neg_score + _neg_log_sigmoid(-logit_n)

    # --- auxiliary BCE-with-logits (only enc_u needs the A-space matmul) --
    # bias folded via the ones lane (row D of wT holds b); A-pad lanes give x==0
    x = jnp.dot(u, wT_ref[...], preferred_element_type=jnp.float32)  # (TB, A_pad)
    t = aug_ref[...].astype(jnp.float32)                              # 0/1 targets
    bce = jnp.maximum(x, 0.0) - x * t + jnp.log1p(jnp.exp(-jnp.abs(x)))
    bce_row = jnp.sum(bce, axis=-1, keepdims=True)                    # (TB, 1)
    if A_real != A_pad:
        # pad lanes have x == 0, t == 0 -> exactly ln(2) each; scalar correction
        bce_row = bce_row - jnp.float32((A_pad - A_real) * _LN2)
    bce_sum = jnp.sum(bce_row * mask_ref[...])                        # mask after reduce

    inv_B = scales_ref[0]          # 1 / B
    aux_scale = scales_ref[1]      # aux_coef / (max(n_sel,1) * A_real)
    tile_total = jnp.sum(score + neg_score) * inv_B + bce_sum * aux_scale
    out_ref[...] = out_ref[...] + tile_total


def skipgram_aux_forward(pos_u, pos_v, neg_v, params, aux_coef=1e-4, tile_b=256):
    u_emb = params["u_embeddings"]     # (V, D)
    v_emb = params["v_embeddings"]     # (V, D)
    enc_w = params["encoder_w"]        # (A, D)  PyTorch Linear weight layout
    enc_b = params["encoder_b"]        # (A,)
    a_emb = params["a_embeddings"]     # (V, A)  frozen augmentive features
    masks = params["binary_masks"]     # (V, 1)

    B = pos_u.shape[0]
    N = neg_v.shape[1]
    D = u_emb.shape[1]
    A = enc_w.shape[0]
    A_pad = ((A + 127) // 128) * 128
    D_pad = ((D + 1 + 127) // 128) * 128     # +1 lane for the folded bias

    TB = min(tile_b, B)
    assert B % TB == 0 and TB % 8 == 0, "batch must tile into multiples of 8"
    G = B // TB
    C = 2 if (G >= 2 and G % 2 == 0) else 1  # v7x megacore split (harmless on 1-TC chips)
    Gpc = G // C

    # --- glue: embedding-table gathers (plain JAX) ---------------------------
    # TODO(synk): single-row gathers stay outside the kernel; per-row DMAs of
    # D*2 bytes are too small to win inside Pallas.
    emb_u = jnp.take(u_emb, pos_u, axis=0)                        # (B, D)
    emb_v = jnp.take(v_emb, pos_v, axis=0)                        # (B, D)
    # negatives ordered (tile, negative, batch-row) so each tile holds N
    # contiguous TB-row blocks aligned with the tile's batch rows
    neg_ids = neg_v.reshape(G, TB, N).transpose(0, 2, 1).reshape(-1)
    emb_neg = jnp.take(v_emb, neg_ids, axis=0)                    # (G*N*TB, D)
    aug_u = jnp.take(a_emb, pos_u, axis=0)                        # (B, A)
    mask_u = jnp.take(masks, pos_u, axis=0).astype(jnp.float32)   # (B, 1)

    def pad_ones_bf16(x):   # (rows, D) -> (rows, D_pad) bf16 with ones at lane D
        out = jnp.zeros((x.shape[0], D_pad), jnp.bfloat16)
        out = out.at[:, :D].set(x.astype(jnp.bfloat16))
        out = out.at[:, D].set(1.0)
        return out

    u_pad = pad_ones_bf16(emb_u)                                  # (B, D_pad)
    v_pad = pad_ones_bf16(emb_v)                                  # (B, D_pad)
    neg_pad = pad_ones_bf16(emb_neg)                              # (G*N*TB, D_pad)

    # resident f32 weights: bias-augmented Gram matrix and encoder W^T (+bias row)
    W = enc_w.astype(jnp.float32)                                 # (A, D)
    b = enc_b.astype(jnp.float32)                                 # (A,)
    Gram = W.T @ W                                                # (D, D)
    wb = W.T @ b                                                  # (D,)
    bb = jnp.dot(b, b)                                            # scalar
    G_aug = jnp.zeros((D_pad, D_pad), jnp.float32)
    G_aug = G_aug.at[:D, :D].set(Gram)
    G_aug = G_aug.at[:D, D].set(wb)
    G_aug = G_aug.at[D, :D].set(wb)
    G_aug = G_aug.at[D, D].set(bb)

    wT_aug = jnp.zeros((D_pad, A_pad), jnp.float32)
    wT_aug = wT_aug.at[:D, :A].set(W.T)
    wT_aug = wT_aug.at[D, :A].set(b)                              # bias row (D padding)

    # bf16 aug targets (exact 0/1 values -> lossless), zero in A-pad lanes
    aug_p = jnp.zeros((B, A_pad), jnp.bfloat16).at[:, :A].set(aug_u.astype(jnp.bfloat16))

    # scalar normalizers precomputed once, delivered via SMEM
    n_sel = jnp.maximum(jnp.sum(mask_u), 1.0)                     # guard empty selection
    scales = jnp.stack([jnp.float32(1.0 / B),
                        jnp.float32(aux_coef) / (n_sel * jnp.float32(A))])

    kernel = functools.partial(skipgram_aux_kernel,
                               TB=TB, N=N, A_pad=A_pad, A_real=A)

    cost = pl.CostEstimate(
        flops=int(2 * B * D_pad * (D_pad + A_pad)            # Gram + BCE matmuls
                  + 8 * B * (A_pad + D_pad * (N + 2))),       # elementwise/reduces
        transcendentals=int(2 * B * A_pad + 2 * B * (N + 1)), # exp + log1p per element
        bytes_accessed=int((u_pad.size + v_pad.size + neg_pad.size + aug_p.size) * 2
                           + (G_aug.size + wT_aug.size + mask_u.size + scales.size) * 4
                           + C * 128 * 4),
    )

    out = pl.pallas_call(
        kernel,
        out_shape=jax.ShapeDtypeStruct((1, C * 128), jnp.float32),
        grid=(C, Gpc),
        in_specs=[
            pl.BlockSpec(memory_space=pltpu.MemorySpace.SMEM),            # scales (2,)
            pl.BlockSpec((TB, D_pad), lambda c, g: (c * Gpc + g, 0)),     # u tiles
            pl.BlockSpec((TB, D_pad), lambda c, g: (c * Gpc + g, 0)),     # v tiles
            pl.BlockSpec((N * TB, D_pad), lambda c, g: (c * Gpc + g, 0)), # negatives
            pl.BlockSpec((D_pad, D_pad), lambda c, g: (0, 0)),            # G_aug (resident)
            pl.BlockSpec((D_pad, A_pad), lambda c, g: (0, 0)),            # W^T+bias (resident)
            pl.BlockSpec((TB, A_pad), lambda c, g: (c * Gpc + g, 0)),     # aug targets
            pl.BlockSpec((TB, 1), lambda c, g: (c * Gpc + g, 0)),         # row mask
        ],
        # lane-dense per-core partial sums; batch axis carries the accumulator
        out_specs=pl.BlockSpec((1, 128), lambda c, g: (0, c)),
        compiler_params=pltpu.CompilerParams(
            dimension_semantics=("parallel", "arbitrary")),
        cost_estimate=cost,
    )(scales, u_pad, v_pad, neg_pad, G_aug, wT_aug, aug_p, mask_u)

    # every lane of a core's block holds the same partial sum; reduce over cores
    return jnp.sum(out.reshape(C, 128)[:, 0])


def skipgram_aux_reference(pos_u, pos_v, neg_v, params, aux_coef=1e-4):
    """Pure-JAX f32 reference mirroring the PyTorch forward."""
    u_emb, v_emb = params["u_embeddings"], params["v_embeddings"]
    enc_w, enc_b = params["encoder_w"], params["encoder_b"]
    a_emb, masks = params["a_embeddings"], params["binary_masks"]
    A = enc_w.shape[0]
    emb_u = jnp.take(u_emb, pos_u, axis=0) @ enc_w.T + enc_b            # (B, A)
    emb_v = jnp.take(v_emb, pos_v, axis=0) @ enc_w.T + enc_b            # (B, A)
    emb_neg = jnp.take(v_emb, neg_v, axis=0) @ enc_w.T + enc_b          # (B, N, A)
    m = jnp.take(masks, pos_u, axis=0)                                  # (B, 1)
    x, t = emb_u, jnp.take(a_emb, pos_u, axis=0)
    bce = jnp.maximum(x, 0.0) - x * t + jnp.log1p(jnp.exp(-jnp.abs(x)))
    n_sel = jnp.maximum(jnp.sum(m), 1.0)
    aux = jnp.sum(bce * m) / (n_sel * A)
    score = -jax.nn.log_sigmoid(jnp.clip(jnp.sum(emb_u * emb_v, axis=1), -10.0, 10.0))
    neg = jnp.clip(jnp.einsum("bna,ba->bn", emb_neg, emb_u), -10.0, 10.0)
    neg = -jnp.sum(jax.nn.log_sigmoid(-neg), axis=1)
    return jnp.mean(score + neg) + aux_coef * aux


def init_params(key, emb_size, emb_dimension, aug_dimension):
    ku, kv, kw, kb, ka, km = jax.random.split(key, 6)
    initrange = 1.0 / emb_dimension
    u_emb = jax.random.uniform(ku, (emb_size, emb_dimension), jnp.float32,
                               -initrange, initrange)
    # PyTorch inits v_embeddings to zero; use small random values so the
    # scores are non-degenerate (shapes/semantics unchanged).
    v_emb = 0.01 * jax.random.normal(kv, (emb_size, emb_dimension), jnp.float32)
    enc_w = 0.001 * jax.random.normal(kw, (aug_dimension, emb_dimension), jnp.float32)
    enc_b = jax.random.uniform(kb, (aug_dimension,), jnp.float32,
                               -1.0 / emb_dimension ** 0.5, 1.0 / emb_dimension ** 0.5)
    a_emb = (jax.random.uniform(ka, (emb_size, aug_dimension)) > 0.5).astype(jnp.float32)
    binary_masks = (jax.random.uniform(km, (emb_size, 1)) > 0.3).astype(jnp.float32)
    binary_masks = binary_masks.at[0, 0].set(1.0)   # ≥1 node has a fingerprint
    return {
        "u_embeddings": u_emb,
        "v_embeddings": v_emb,
        "encoder_w": enc_w,
        "encoder_b": enc_b,
        "a_embeddings": a_emb,
        "binary_masks": binary_masks,
    }


if __name__ == "__main__":
    # TODO(synk): load_augmentive_features reads a pickle from disk; the
    # augmentive matrix / binary mask are generated deterministically in-script.
    V = 64        # emb_size (vocab / number of graph nodes)
    D = 32        # emb_dimension
    A = 120       # aug_dimension (881 in the real dataset) -> padded to 128 lanes
    B = 16        # batch of (pos_u, pos_v) pairs
    N = 8         # negatives per positive

    key = jax.random.PRNGKey(0)
    kp, ki1, ki2, ki3 = jax.random.split(key, 4)
    params = init_params(kp, V, D, A)

    pos_u = jax.random.randint(ki1, (B,), 0, V, dtype=jnp.int32)
    pos_v = jax.random.randint(ki2, (B,), 0, V, dtype=jnp.int32)
    neg_v = jax.random.randint(ki3, (B, N), 0, V, dtype=jnp.int32)
    pos_u = pos_u.at[0].set(0)   # guarantee ≥1 masked row in this batch

    loss = skipgram_aux_forward(pos_u, pos_v, neg_v, params,
                                aux_coef=1e-4, tile_b=8)   # tile_b=8 -> 2 tiles, 2-core split
    jax.block_until_ready(loss)
    ref = skipgram_aux_reference(pos_u, pos_v, neg_v, params, aux_coef=1e-4)

    assert loss.shape == () and bool(jnp.isfinite(loss))
    assert jnp.allclose(loss, ref, rtol=2e-2, atol=1e-3), (loss, ref)
    print("KERNEL_OK")
</pallas_src>

<mosaic_0001>
module attributes {stable_mosaic.version = 11 : i64} {
  func.func @skipgram_aux_kernel(%arg0: i32, %arg1: i32, %arg2: memref<2xf32, #tpu.memory_space<smem>>, %arg3: memref<8x128xbf16, #tpu.memory_space<vmem>>, %arg4: memref<8x128xbf16, #tpu.memory_space<vmem>>, %arg5: memref<64x128xbf16, #tpu.memory_space<vmem>>, %arg6: memref<128x128xf32, #tpu.memory_space<vmem>>, %arg7: memref<128x128xf32, #tpu.memory_space<vmem>>, %arg8: memref<8x128xbf16, #tpu.memory_space<vmem>>, %arg9: memref<8x1xf32, #tpu.memory_space<vmem>>, %arg10: memref<1x128xf32, #tpu.memory_space<vmem>>) attributes {dimension_semantics = [#tpu.dimension_semantics<parallel>, #tpu.dimension_semantics<arbitrary>], iteration_bounds = array<i64: 2, 1>, scalar_prefetch = 0 : i64, scratch_operands = 0 : i64, tpu.core_type = #tpu.core_type<tc>, window_params = [{transform_indices = @transform_0, window_bounds = array<i64: 2>}, {transform_indices = @transform_1, window_bounds = array<i64: 8, 128>}, {transform_indices = @transform_2, window_bounds = array<i64: 8, 128>}, {transform_indices = @transform_3, window_bounds = array<i64: 64, 128>}, {pipeline_mode = #tpu.pipeline_mode<synchronous>, transform_indices = @transform_4, window_bounds = array<i64: 128, 128>}, {pipeline_mode = #tpu.pipeline_mode<synchronous>, transform_indices = @transform_5, window_bounds = array<i64: 128, 128>}, {transform_indices = @transform_6, window_bounds = array<i64: 8, 128>}, {transform_indices = @transform_7, window_bounds = array<i64: 8, 1>}, {transform_indices = @transform_8, window_bounds = array<i64: 1, 128>}]} {
    %c0_i32 = arith.constant 0 : i32
    %0 = arith.cmpi eq, %arg1, %c0_i32 : i32
    %1 = arith.extui %0 : i1 to i32
    %c0_i32_0 = arith.constant 0 : i32
    %2 = arith.cmpi ne, %1, %c0_i32_0 : i32
    scf.if %2 {
      %cst_96 = arith.constant 0.000000e+00 : f32
      %241 = vector.broadcast %cst_96 : f32 to vector<1x128xf32>
      %c0_97 = arith.constant 0 : index
      %c0_98 = arith.constant 0 : index
      %242 = vector.load %arg10[%c0_97, %c0_98] : memref<1x128xf32, #tpu.memory_space<vmem>>, vector<1x128xf32>
      tpu.vector_store %arg10[%c0_97, %c0_98], %241 {strides = array<i32>} : memref<1x128xf32, #tpu.memory_space<vmem>>, vector<1x128xf32>,
    } else {
    }
    %c0 = arith.constant 0 : index
    %c0_1 = arith.constant 0 : index
    %3 = vector.load %arg3[%c0, %c0_1] : memref<8x128xbf16, #tpu.memory_space<vmem>>, vector<8x128xbf16>
    %4 = arith.extf %3 : vector<8x128xbf16> to vector<8x128xf32>
    %c0_2 = arith.constant 0 : index
    %c0_3 = arith.constant 0 : index
    %5 = vector.load %arg4[%c0_2, %c0_3] : memref<8x128xbf16, #tpu.memory_space<vmem>>, vector<8x128xbf16>
    %6 = arith.extf %5 : vector<8x128xbf16> to vector<8x128xf32>
    %c0_4 = arith.constant 0 : index
    %c0_5 = arith.constant 0 : index
    %7 = vector.load %arg6[%c0_4, %c0_5] : memref<128x128xf32, #tpu.memory_space<vmem>>, vector<128x128xf32>
    %cst = arith.constant dense<0.000000e+00> : vector<8x128xf32>
    %8 = tpu.matmul %4, %7, %cst {dimension_numbers = #tpu.dot_dimension_numbers<[1], [0], [0], [1], [0, 0, 1, 1], [], []>} : vector<8x128xf32>, vector<128x128xf32>, vector<8x128xf32> -> vector<8x128xf32>
    %9 = arith.mulf %8, %6 : vector<8x128xf32>
    %cst_6 = arith.constant dense<0.000000e+00> : vector<8xf32>
    %10 = vector.multi_reduction <add>, %9, %cst_6 [1] : vector<8x128xf32> to vector<8xf32>
    %11 = vector.shape_cast %10 : vector<8xf32> to vector<8x1xf32>
    %cst_7 = arith.constant -1.000000e+01 : f32
    %cst_8 = arith.constant 1.000000e+01 : f32
    %12 = vector.broadcast %cst_7 : f32 to vector<8x1xf32>
    %13 = arith.maximumf %12, %11 : vector<8x1xf32>
    %14 = vector.broadcast %cst_8 : f32 to vector<8x1xf32>
    %15 = arith.minimumf %14, %13 : vector<8x1xf32>
    %cst_9 = arith.constant 0.000000e+00 : f32
    %16 = vector.broadcast %cst_9 : f32 to vector<8x1xf32>
    %17 = arith.subf %16, %15 : vector<8x1xf32>
    %cst_10 = arith.constant 0.000000e+00 : f32
    %18 = vector.broadcast %cst_10 : f32 to vector<8x1xf32>
    %19 = arith.maximumf %17, %18 : vector<8x1xf32>
    %20 = math.absf %15 : vector<8x1xf32>
    %cst_11 = arith.constant 0.000000e+00 : f32
    %21 = vector.broadcast %cst_11 : f32 to vector<8x1xf32>
    %22 = arith.subf %21, %20 : vector<8x1xf32>
    %23 = math.exp %22 : vector<8x1xf32>
    %24 = math.log1p %23 : vector<8x1xf32>
    %25 = arith.addf %19, %24 : vector<8x1xf32>
    %cst_12 = arith.constant 0.000000e+00 : f32
    %26 = vector.broadcast %cst_12 : f32 to vector<8x1xf32>
    %c0_13 = arith.constant 0 : index
    %c0_14 = arith.constant 0 : index
    %27 = vector.load %arg5[%c0_13, %c0_14] : memref<64x128xbf16, #tpu.memory_space<vmem>>, vector<8x128xbf16>
    %28 = arith.extf %27 : vector<8x128xbf16> to vector<8x128xf32>
    %29 = arith.mulf %8, %28 : vector<8x128xf32>
    %cst_15 = arith.constant dense<0.000000e+00> : vector<8xf32>
    %30 = vector.multi_reduction <add>, %29, %cst_15 [1] : vector<8x128xf32> to vector<8xf32>
    %31 = vector.shape_cast %30 : vector<8xf32> to vector<8x1xf32>
    %cst_16 = arith.constant -1.000000e+01 : f32
    %cst_17 = arith.constant 1.000000e+01 : f32
    %32 = vector.broadcast %cst_16 : f32 to vector<8x1xf32>
    %33 = arith.maximumf %32, %31 : vector<8x1xf32>
    %34 = vector.broadcast %cst_17 : f32 to vector<8x1xf32>
    %35 = arith.minimumf %34, %33 : vector<8x1xf32>
    %cst_18 = arith.constant 0.000000e+00 : f32
    %36 = vector.broadcast %cst_18 : f32 to vector<8x1xf32>
    %37 = arith.subf %36, %35 : vector<8x1xf32>
    %cst_19 = arith.constant 0.000000e+00 : f32
    %38 = vector.broadcast %cst_19 : f32 to vector<8x1xf32>
    %39 = arith.subf %38, %37 : vector<8x1xf32>
    %cst_20 = arith.constant 0.000000e+00 : f32
    %40 = vector.broadcast %cst_20 : f32 to vector<8x1xf32>
    %41 = arith.maximumf %39, %40 : vector<8x1xf32>
    %42 = math.absf %37 : vector<8x1xf32>
    %cst_21 = arith.constant 0.000000e+00 : f32
    %43 = vector.broadcast %cst_21 : f32 to vector<8x1xf32>
    %44 = arith.subf %43, %42 : vector<8x1xf32>
    %45 = math.exp %44 : vector<8x1xf32>
    %46 = math.log1p %45 : vector<8x1xf32>
    %47 = arith.addf %41, %46 : vector<8x1xf32>
    %48 = arith.addf %26, %47 : vector<8x1xf32>
    %c8 = arith.constant 8 : index
    %c0_22 = arith.constant 0 : index
    %49 = vector.load %arg5[%c8, %c0_22] : memref<64x128xbf16, #tpu.memory_space<vmem>>, vector<8x128xbf16>
    %50 = arith.extf %49 : vector<8x128xbf16> to vector<8x128xf32>
    %51 = arith.mulf %8, %50 : vector<8x128xf32>
    %cst_23 = arith.constant dense<0.000000e+00> : vector<8xf32>
    %52 = vector.multi_reduction <add>, %51, %cst_23 [1] : vector<8x128xf32> to vector<8xf32>
    %53 = vector.shape_cast %52 : vector<8xf32> to vector<8x1xf32>
    %cst_24 = arith.constant -1.000000e+01 : f32
    %cst_25 = arith.constant 1.000000e+01 : f32
    %54 = vector.broadcast %cst_24 : f32 to vector<8x1xf32>
    %55 = arith.maximumf %54, %53 : vector<8x1xf32>
    %56 = vector.broadcast %cst_25 : f32 to vector<8x1xf32>
    %57 = arith.minimumf %56, %55 : vector<8x1xf32>
    %cst_26 = arith.constant 0.000000e+00 : f32
    %58 = vector.broadcast %cst_26 : f32 to vector<8x1xf32>
    %59 = arith.subf %58, %57 : vector<8x1xf32>
    %cst_27 = arith.constant 0.000000e+00 : f32
    %60 = vector.broadcast %cst_27 : f32 to vector<8x1xf32>
    %61 = arith.subf %60, %59 : vector<8x1xf32>
    %cst_28 = arith.constant 0.000000e+00 : f32
    %62 = vector.broadcast %cst_28 : f32 to vector<8x1xf32>
    %63 = arith.maximumf %61, %62 : vector<8x1xf32>
    %64 = math.absf %59 : vector<8x1xf32>
    %cst_29 = arith.constant 0.000000e+00 : f32
    %65 = vector.broadcast %cst_29 : f32 to vector<8x1xf32>
    %66 = arith.subf %65, %64 : vector<8x1xf32>
    %67 = math.exp %66 : vector<8x1xf32>
    %68 = math.log1p %67 : vector<8x1xf32>
    %69 = arith.addf %63, %68 : vector<8x1xf32>
    %70 = arith.addf %48, %69 : vector<8x1xf32>
    %c16 = arith.constant 16 : index
    %c0_30 = arith.constant 0 : index
    %71 = vector.load %arg5[%c16, %c0_30] : memref<64x128xbf16, #tpu.memory_space<vmem>>, vector<8x128xbf16>
    %72 = arith.extf %71 : vector<8x128xbf16> to vector<8x128xf32>
    %73 = arith.mulf %8, %72 : vector<8x128xf32>
    %cst_31 = arith.constant dense<0.000000e+00> : vector<8xf32>
    %74 = vector.multi_reduction <add>, %73, %cst_31 [1] : vector<8x128xf32> to vector<8xf32>
    %75 = vector.shape_cast %74 : vector<8xf32> to vector<8x1xf32>
    %cst_32 = arith.constant -1.000000e+01 : f32
    %cst_33 = arith.constant 1.000000e+01 : f32
    %76 = vector.broadcast %cst_32 : f32 to vector<8x1xf32>
    %77 = arith.maximumf %76, %75 : vector<8x1xf32>
    %78 = vector.broadcast %cst_33 : f32 to vector<8x1xf32>
    %79 = arith.minimumf %78, %77 : vector<8x1xf32>
    %cst_34 = arith.constant 0.000000e+00 : f32
    %80 = vector.broadcast %cst_34 : f32 to vector<8x1xf32>
    %81 = arith.subf %80, %79 : vector<8x1xf32>
    %cst_35 = arith.constant 0.000000e+00 : f32
    %82 = vector.broadcast %cst_35 : f32 to vector<8x1xf32>
    %83 = arith.subf %82, %81 : vector<8x1xf32>
    %cst_36 = arith.constant 0.000000e+00 : f32
    %84 = vector.broadcast %cst_36 : f32 to vector<8x1xf32>
    %85 = arith.maximumf %83, %84 : vector<8x1xf32>
    %86 = math.absf %81 : vector<8x1xf32>
    %cst_37 = arith.constant 0.000000e+00 : f32
    %87 = vector.broadcast %cst_37 : f32 to vector<8x1xf32>
    %88 = arith.subf %87, %86 : vector<8x1xf32>
    %89 = math.exp %88 : vector<8x1xf32>
    %90 = math.log1p %89 : vector<8x1xf32>
    %91 = arith.addf %85, %90 : vector<8x1xf32>
    %92 = arith.addf %70, %91 : vector<8x1xf32>
    %c24 = arith.constant 24 : index
    %c0_38 = arith.constant 0 : index
    %93 = vector.load %arg5[%c24, %c0_38] : memref<64x128xbf16, #tpu.memory_space<vmem>>, vector<8x128xbf16>
    %94 = arith.extf %93 : vector<8x128xbf16> to vector<8x128xf32>
    %95 = arith.mulf %8, %94 : vector<8x128xf32>
    %cst_39 = arith.constant dense<0.000000e+00> : vector<8xf32>
    %96 = vector.multi_reduction <add>, %95, %cst_39 [1] : vector<8x128xf32> to vector<8xf32>
    %97 = vector.shape_cast %96 : vector<8xf32> to vector<8x1xf32>
    %cst_40 = arith.constant -1.000000e+01 : f32
    %cst_41 = arith.constant 1.000000e+01 : f32
    %98 = vector.broadcast %cst_40 : f32 to vector<8x1xf32>
    %99 = arith.maximumf %98, %97 : vector<8x1xf32>
    %100 = vector.broadcast %cst_41 : f32 to vector<8x1xf32>
    %101 = arith.minimumf %100, %99 : vector<8x1xf32>
    %cst_42 = arith.constant 0.000000e+00 : f32
    %102 = vector.broadcast %cst_42 : f32 to vector<8x1xf32>
    %103 = arith.subf %102, %101 : vector<8x1xf32>
    %cst_43 = arith.constant 0.000000e+00 : f32
    %104 = vector.broadcast %cst_43 : f32 to vector<8x1xf32>
    %105 = arith.subf %104, %103 : vector<8x1xf32>
    %cst_44 = arith.constant 0.000000e+00 : f32
    %106 = vector.broadcast %cst_44 : f32 to vector<8x1xf32>
    %107 = arith.maximumf %105, %106 : vector<8x1xf32>
    %108 = math.absf %103 : vector<8x1xf32>
    %cst_45 = arith.constant 0.000000e+00 : f32
    %109 = vector.broadcast %cst_45 : f32 to vector<8x1xf32>
    %110 = arith.subf %109, %108 : vector<8x1xf32>
    %111 = math.exp %110 : vector<8x1xf32>
    %112 = math.log1p %111 : vector<8x1xf32>
    %113 = arith.addf %107, %112 : vector<8x1xf32>
    %114 = arith.addf %92, %113 : vector<8x1xf32>
    %c32 = arith.constant 32 : index
    %c0_46 = arith.constant 0 : index
    %115 = vector.load %arg5[%c32, %c0_46] : memref<64x128xbf16, #tpu.memory_space<vmem>>, vector<8x128xbf16>
    %116 = arith.extf %115 : vector<8x128xbf16> to vector<8x128xf32>
    %117 = arith.mulf %8, %116 : vector<8x128xf32>
    %cst_47 = arith.constant dense<0.000000e+00> : vector<8xf32>
    %118 = vector.multi_reduction <add>, %117, %cst_47 [1] : vector<8x128xf32> to vector<8xf32>
    %119 = vector.shape_cast %118 : vector<8xf32> to vector<8x1xf32>
    %cst_48 = arith.constant -1.000000e+01 : f32
    %cst_49 = arith.constant 1.000000e+01 : f32
    %120 = vector.broadcast %cst_48 : f32 to vector<8x1xf32>
    %121 = arith.maximumf %120, %119 : vector<8x1xf32>
    %122 = vector.broadcast %cst_49 : f32 to vector<8x1xf32>
    %123 = arith.minimumf %122, %121 : vector<8x1xf32>
    %cst_50 = arith.constant 0.000000e+00 : f32
    %124 = vector.broadcast %cst_50 : f32 to vector<8x1xf32>
    %125 = arith.subf %124, %123 : vector<8x1xf32>
    %cst_51 = arith.constant 0.000000e+00 : f32
    %126 = vector.broadcast %cst_51 : f32 to vector<8x1xf32>
    %127 = arith.subf %126, %125 : vector<8x1xf32>
    %cst_52 = arith.constant 0.000000e+00 : f32
    %128 = vector.broadcast %cst_52 : f32 to vector<8x1xf32>
    %129 = arith.maximumf %127, %128 : vector<8x1xf32>
    %130 = math.absf %125 : vector<8x1xf32>
    %cst_53 = arith.constant 0.000000e+00 : f32
    %131 = vector.broadcast %cst_53 : f32 to vector<8x1xf32>
    %132 = arith.subf %131, %130 : vector<8x1xf32>
    %133 = math.exp %132 : vector<8x1xf32>
    %134 = math.log1p %133 : vector<8x1xf32>
    %135 = arith.addf %129, %134 : vector<8x1xf32>
    %136 = arith.addf %114, %135 : vector<8x1xf32>
    %c40 = arith.constant 40 : index
    %c0_54 = arith.constant 0 : index
    %137 = vector.load %arg5[%c40, %c0_54] : memref<64x128xbf16, #tpu.memory_space<vmem>>, vector<8x128xbf16>
    %138 = arith.extf %137 : vector<8x128xbf16> to vector<8x128xf32>
    %139 = arith.mulf %8, %138 : vector<8x128xf32>
    %cst_55 = arith.constant dense<0.000000e+00> : vector<8xf32>
    %140 = vector.multi_reduction <add>, %139, %cst_55 [1] : vector<8x128xf32> to vector<8xf32>
    %141 = vector.shape_cast %140 : vector<8xf32> to vector<8x1xf32>
    %cst_56 = arith.constant -1.000000e+01 : f32
    %cst_57 = arith.constant 1.000000e+01 : f32
    %142 = vector.broadcast %cst_56 : f32 to vector<8x1xf32>
    %143 = arith.maximumf %142, %141 : vector<8x1xf32>
    %144 = vector.broadcast %cst_57 : f32 to vector<8x1xf32>
    %145 = arith.minimumf %144, %143 : vector<8x1xf32>
    %cst_58 = arith.constant 0.000000e+00 : f32
    %146 = vector.broadcast %cst_58 : f32 to vector<8x1xf32>
    %147 = arith.subf %146, %145 : vector<8x1xf32>
    %cst_59 = arith.constant 0.000000e+00 : f32
    %148 = vector.broadcast %cst_59 : f32 to vector<8x1xf32>
    %149 = arith.subf %148, %147 : vector<8x1xf32>
    %cst_60 = arith.constant 0.000000e+00 : f32
    %150 = vector.broadcast %cst_60 : f32 to vector<8x1xf32>
    %151 = arith.maximumf %149, %150 : vector<8x1xf32>
    %152 = math.absf %147 : vector<8x1xf32>
    %cst_61 = arith.constant 0.000000e+00 : f32
    %153 = vector.broadcast %cst_61 : f32 to vector<8x1xf32>
    %154 = arith.subf %153, %152 : vector<8x1xf32>
    %155 = math.exp %154 : vector<8x1xf32>
    %156 = math.log1p %155 : vector<8x1xf32>
    %157 = arith.addf %151, %156 : vector<8x1xf32>
    %158 = arith.addf %136, %157 : vector<8x1xf32>
    %c48 = arith.constant 48 : index
    %c0_62 = arith.constant 0 : index
    %159 = vector.load %arg5[%c48, %c0_62] : memref<64x128xbf16, #tpu.memory_space<vmem>>, vector<8x128xbf16>
    %160 = arith.extf %159 : vector<8x128xbf16> to vector<8x128xf32>
    %161 = arith.mulf %8, %160 : vector<8x128xf32>
    %cst_63 = arith.constant dense<0.000000e+00> : vector<8xf32>
    %162 = vector.multi_reduction <add>, %161, %cst_63 [1] : vector<8x128xf32> to vector<8xf32>
    %163 = vector.shape_cast %162 : vector<8xf32> to vector<8x1xf32>
    %cst_64 = arith.constant -1.000000e+01 : f32
    %cst_65 = arith.constant 1.000000e+01 : f32
    %164 = vector.broadcast %cst_64 : f32 to vector<8x1xf32>
    %165 = arith.maximumf %164, %163 : vector<8x1xf32>
    %166 = vector.broadcast %cst_65 : f32 to vector<8x1xf32>
    %167 = arith.minimumf %166, %165 : vector<8x1xf32>
    %cst_66 = arith.constant 0.000000e+00 : f32
    %168 = vector.broadcast %cst_66 : f32 to vector<8x1xf32>
    %169 = arith.subf %168, %167 : vector<8x1xf32>
    %cst_67 = arith.constant 0.000000e+00 : f32
    %170 = vector.broadcast %cst_67 : f32 to vector<8x1xf32>
    %171 = arith.subf %170, %169 : vector<8x1xf32>
    %cst_68 = arith.constant 0.000000e+00 : f32
    %172 = vector.broadcast %cst_68 : f32 to vector<8x1xf32>
    %173 = arith.maximumf %171, %172 : vector<8x1xf32>
    %174 = math.absf %169 : vector<8x1xf32>
    %cst_69 = arith.constant 0.000000e+00 : f32
    %175 = vector.broadcast %cst_69 : f32 to vector<8x1xf32>
    %176 = arith.subf %175, %174 : vector<8x1xf32>
    %177 = math.exp %176 : vector<8x1xf32>
    %178 = math.log1p %177 : vector<8x1xf32>
    %179 = arith.addf %173, %178 : vector<8x1xf32>
    %180 = arith.addf %158, %179 : vector<8x1xf32>
    %c56 = arith.constant 56 : index
    %c0_70 = arith.constant 0 : index
    %181 = vector.load %arg5[%c56, %c0_70] : memref<64x128xbf16, #tpu.memory_space<vmem>>, vector<8x128xbf16>
    %182 = arith.extf %181 : vector<8x128xbf16> to vector<8x128xf32>
    %183 = arith.mulf %8, %182 : vector<8x128xf32>
    %cst_71 = arith.constant dense<0.000000e+00> : vector<8xf32>
    %184 = vector.multi_reduction <add>, %183, %cst_71 [1] : vector<8x128xf32> to vector<8xf32>
    %185 = vector.shape_cast %184 : vector<8xf32> to vector<8x1xf32>
    %cst_72 = arith.constant -1.000000e+01 : f32
    %cst_73 = arith.constant 1.000000e+01 : f32
    %186 = vector.broadcast %cst_72 : f32 to vector<8x1xf32>
    %187 = arith.maximumf %186, %185 : vector<8x1xf32>
    %188 = vector.broadcast %cst_73 : f32 to vector<8x1xf32>
    %189 = arith.minimumf %188, %187 : vector<8x1xf32>
    %cst_74 = arith.constant 0.000000e+00 : f32
    %190 = vector.broadcast %cst_74 : f32 to vector<8x1xf32>
    %191 = arith.subf %190, %189 : vector<8x1xf32>
    %cst_75 = arith.constant 0.000000e+00 : f32
    %192 = vector.broadcast %cst_75 : f32 to vector<8x1xf32>
    %193 = arith.subf %192, %191 : vector<8x1xf32>
    %cst_76 = arith.constant 0.000000e+00 : f32
    %194 = vector.broadcast %cst_76 : f32 to vector<8x1xf32>
    %195 = arith.maximumf %193, %194 : vector<8x1xf32>
    %196 = math.absf %191 : vector<8x1xf32>
    %cst_77 = arith.constant 0.000000e+00 : f32
    %197 = vector.broadcast %cst_77 : f32 to vector<8x1xf32>
    %198 = arith.subf %197, %196 : vector<8x1xf32>
    %199 = math.exp %198 : vector<8x1xf32>
    %200 = math.log1p %199 : vector<8x1xf32>
    %201 = arith.addf %195, %200 : vector<8x1xf32>
    %202 = arith.addf %180, %201 : vector<8x1xf32>
    %c0_78 = arith.constant 0 : index
    %c0_79 = arith.constant 0 : index
    %203 = vector.load %arg7[%c0_78, %c0_79] : memref<128x128xf32, #tpu.memory_space<vmem>>, vector<128x128xf32>
    %cst_80 = arith.constant dense<0.000000e+00> : vector<8x128xf32>
    %204 = tpu.matmul %4, %203, %cst_80 {dimension_numbers = #tpu.dot_dimension_numbers<[1], [0], [0], [1], [0, 0, 1, 1], [], []>} : vector<8x128xf32>, vector<128x128xf32>, vector<8x128xf32> -> vector<8x128xf32>
    %c0_81 = arith.constant 0 : index
    %c0_82 = arith.constant 0 : index
    %205 = vector.load %arg8[%c0_81, %c0_82] : memref<8x128xbf16, #tpu.memory_space<vmem>>, vector<8x128xbf16>
    %206 = arith.extf %205 : vector<8x128xbf16> to vector<8x128xf32>
    %cst_83 = arith.constant 0.000000e+00 : f32
    %207 = vector.broadcast %cst_83 : f32 to vector<8x128xf32>
    %208 = arith.maximumf %204, %207 : vector<8x128xf32>
    %209 = arith.mulf %204, %206 : vector<8x128xf32>
    %210 = arith.subf %208, %209 : vector<8x128xf32>
    %211 = math.absf %204 : vector<8x128xf32>
    %cst_84 = arith.constant 0.000000e+00 : f32
    %212 = vector.broadcast %cst_84 : f32 to vector<8x128xf32>
    %213 = arith.subf %212, %211 : vector<8x128xf32>
    %214 = math.exp %213 : vector<8x128xf32>
    %215 = math.log1p %214 : vector<8x128xf32>
    %216 = arith.addf %210, %215 : vector<8x128xf32>
    %cst_85 = arith.constant dense<0.000000e+00> : vector<8xf32>
    %217 = vector.multi_reduction <add>, %216, %cst_85 [1] : vector<8x128xf32> to vector<8xf32>
    %218 = vector.shape_cast %217 : vector<8xf32> to vector<8x1xf32>
    %cst_86 = arith.constant 5.54517746 : f32
    %219 = vector.broadcast %cst_86 : f32 to vector<8x1xf32>
    %220 = arith.subf %218, %219 : vector<8x1xf32>
    %c0_87 = arith.constant 0 : index
    %c0_88 = arith.constant 0 : index
    %221 = vector.load %arg9[%c0_87, %c0_88] : memref<8x1xf32, #tpu.memory_space<vmem>>, vector<8x1xf32>
    %222 = arith.mulf %220, %221 : vector<8x1xf32>
    %223 = vector.shape_cast %222 : vector<8x1xf32> to vector<1x8x1xf32>
    %cst_89 = arith.constant dense<0.000000e+00> : vector<1xf32>
    %224 = vector.multi_reduction <add>, %223, %cst_89 [1, 2] : vector<1x8x1xf32> to vector<1xf32>
    %225 = vector.shape_cast %224 : vector<1xf32> to vector<1x1x1xf32>
    %226 = vector.extract %225[0, 0, 0] : f32 from vector<1x1x1xf32>
    %c0_90 = arith.constant 0 : index
    %227 = memref.load %arg2[%c0_90] : memref<2xf32, #tpu.memory_space<smem>>
    %c1 = arith.constant 1 : index
    %228 = memref.load %arg2[%c1] : memref<2xf32, #tpu.memory_space<smem>>
    %229 = arith.addf %25, %202 : vector<8x1xf32>
    %230 = vector.shape_cast %229 : vector<8x1xf32> to vector<1x8x1xf32>
    %cst_91 = arith.constant dense<0.000000e+00> : vector<1xf32>
    %231 = vector.multi_reduction <add>, %230, %cst_91 [1, 2] : vector<1x8x1xf32> to vector<1xf32>
    %232 = vector.shape_cast %231 : vector<1xf32> to vector<1x1x1xf32>
    %233 = vector.extract %232[0, 0, 0] : f32 from vector<1x1x1xf32>
    %234 = arith.mulf %233, %227 : f32
    %235 = arith.mulf %226, %228 : f32
    %236 = arith.addf %234, %235 : f32
    %c0_92 = arith.constant 0 : index
    %c0_93 = arith.constant 0 : index
    %237 = vector.load %arg10[%c0_92, %c0_93] : memref<1x128xf32, #tpu.memory_space<vmem>>, vector<1x128xf32>
    %238 = vector.broadcast %236 : f32 to vector<1x128xf32>
    %239 = arith.addf %237, %238 : vector<1x128xf32>
    %c0_94 = arith.constant 0 : index
    %c0_95 = arith.constant 0 : index
    %240 = vector.load %arg10[%c0_94, %c0_95] : memref<1x128xf32, #tpu.memory_space<vmem>>, vector<1x128xf32>
    tpu.vector_store %arg10[%c0_94, %c0_95], %239 {strides = array<i32>} : memref<1x128xf32, #tpu.memory_space<vmem>>, vector<1x128xf32>,
    return
  }
  func.func @transform_0(%arg0: i32, %arg1: i32) -> i32 {
    %c0_i32 = arith.constant 0 : i32
    %c0_i32_0 = arith.constant 0 : i32
    return %c0_i32 : i32
  }
  func.func @transform_1(%arg0: i32, %arg1: i32) -> (i32, i32) {
    %c1_i32 = arith.constant 1 : i32
    %0 = arith.muli %arg0, %c1_i32 : i32
    %1 = arith.addi %0, %arg1 : i32
    %c0_i32 = arith.constant 0 : i32
    %c0_i32_0 = arith.constant 0 : i32
    return %1, %c0_i32 : i32, i32
  }
  func.func @transform_2(%arg0: i32, %arg1: i32) -> (i32, i32) {
    %c1_i32 = arith.constant 1 : i32
    %0 = arith.muli %arg0, %c1_i32 : i32
    %1 = arith.addi %0, %arg1 : i32
    %c0_i32 = arith.constant 0 : i32
    %c0_i32_0 = arith.constant 0 : i32
    return %1, %c0_i32 : i32, i32
  }
  func.func @transform_3(%arg0: i32, %arg1: i32) -> (i32, i32) {
    %c1_i32 = arith.constant 1 : i32
    %0 = arith.muli %arg0, %c1_i32 : i32
    %1 = arith.addi %0, %arg1 : i32
    %c0_i32 = arith.constant 0 : i32
    %c0_i32_0 = arith.constant 0 : i32
    return %1, %c0_i32 : i32, i32
  }
  func.func @transform_4(%arg0: i32, %arg1: i32) -> (i32, i32) {
    %c0_i32 = arith.constant 0 : i32
    %c0_i32_0 = arith.constant 0 : i32
    %c0_i32_1 = arith.constant 0 : i32
    return %c0_i32, %c0_i32_0 : i32, i32
  }
  func.func @transform_5(%arg0: i32, %arg1: i32) -> (i32, i32) {
    %c0_i32 = arith.constant 0 : i32
    %c0_i32_0 = arith.constant 0 : i32
    %c0_i32_1 = arith.constant 0 : i32
    return %c0_i32, %c0_i32_0 : i32, i32
  }
  func.func @transform_6(%arg0: i32, %arg1: i32) -> (i32, i32) {
    %c1_i32 = arith.constant 1 : i32
    %0 = arith.muli %arg0, %c1_i32 : i32
    %1 = arith.addi %0, %arg1 : i32
    %c0_i32 = arith.constant 0 : i32
    %c0_i32_0 = arith.constant 0 : i32
    return %1, %c0_i32 : i32, i32
  }
  func.func @transform_7(%arg0: i32, %arg1: i32) -> (i32, i32) {
    %c1_i32 = arith.constant 1 : i32
    %0 = arith.muli %arg0, %c1_i32 : i32
    %1 = arith.addi %0, %arg1 : i32
    %c0_i32 = arith.constant 0 : i32
    %c0_i32_0 = arith.constant 0 : i32
    return %1, %c0_i32 : i32, i32
  }
  func.func @transform_8(%arg0: i32, %arg1: i32) -> (i32, i32) {
    %c0_i32 = arith.constant 0 : i32
    %c0_i32_0 = arith.constant 0 : i32
    return %c0_i32, %arg0 : i32, i32
  }
}

</mosaic_0001>

<llo_original>
// kernel: tpu_custom_call.1
$region0: #{tpu_custom_call.1}
  #allocation0 [shape = 'u32[]', space=smem, size = 0x4, offset = 0x4, fixed_abs, tag = 'smem constant byte address 0x4 - core index']
  #allocation1 [shape = 'u32[72,128]{1,0:T(1,128)}', space=vmem, size = 0x9000, scoped, tag = 'internal scratch']
  %s0 = inlined_call_operand.vmem [shape: f32[2], index: 0, kind: input, shape index: {}]
  %s1 = inlined_call_operand.vmem [shape: bf16[16,128], index: 1, kind: input, shape index: {}]
  %s2 = inlined_call_operand.vmem [shape: bf16[16,128], index: 2, kind: input, shape index: {}]
  %s3 = inlined_call_operand.hbm [shape: bf16[128,128], index: 3, kind: input, shape index: {}]
  %s4 = inlined_call_operand.hbm [shape: f32[128,128], index: 4, kind: input, shape index: {}]
  %s5 = inlined_call_operand.hbm [shape: f32[128,128], index: 5, kind: input, shape index: {}]
  %s6 = inlined_call_operand.hbm [shape: bf16[16,128], index: 6, kind: input, shape index: {}]
  %s7 = inlined_call_operand.vmem [shape: f32[16,1], index: 7, kind: input, shape index: {}]
  %s8 = inlined_call_operand.hbm [shape: f32[1,256], index: 8, kind: output, shape index: {}]
  %s9 = sld [smem:[#allocation0]]
  $region89: #{tpu_custom_call.1} parent=0
    _
  %s11 = ssub.s32 1, %s9
  %s12 = scalar_select 0, %s11, %s9
  $region1: #{tpu_custom_call.1} parent=0
    #allocation2 [shape = 'u8[512]{0}', space=smem, size = 0x200, scoped, tag = 'input window, operand 0, single buffered']
    #allocation3 [shape = 's32[2]{0}', space=sflag, size = 0x8, scoped, tag = 'scoped memory for tpu_custom_call.1']
    #allocation4 [shape = 's32[2]{0}', space=sflag, size = 0x8, scoped, tag = 'scoped memory for tpu_custom_call.1']
    #allocation5 [shape = 's32[2]{0}', space=sflag, size = 0x8, scoped, tag = 'scoped memory for tpu_custom_call.1']
    #allocation6 [shape = 'u8[32768]{0}', space=vmem, size = 0x8000, scoped, tag = 'input window, operand 3']
    #allocation7 [shape = 'u8[65536]{0}', space=vmem, size = 0x10000, scoped, tag = 'input window, operand 4, single buffered']
    #allocation8 [shape = 's32[1]{0}', space=sflag, size = 0x4, scoped, tag = 'scoped memory for tpu_custom_call.1']
    #allocation9 [shape = 'u8[65536]{0}', space=vmem, size = 0x10000, scoped, tag = 'input window, operand 5, single buffered']
    #allocation10 [shape = 'u8[4096]{0}', space=vmem, size = 0x1000, scoped, tag = 'input window, operand 6']
    #allocation11 [shape = 's32[2]{0}', space=sflag, size = 0x8, scoped, tag = 'scoped memory for tpu_custom_call.1']
    #allocation12 [shape = 'u8[1024]{0}', space=vmem, size = 0x400, scoped, tag = 'output window, operand 0']
    %13 = vsyncpa [#allocation5], 0
    %14 = vsyncpa [#allocation3], 0
    %s15 = scalar_lea.sflag [#allocation3], 1
    %16 = vsyncpa %s15, 0
    %17 = vsyncpa [#allocation8], 0
    %18 = vsyncpa [#allocation11], 0
    %s19 = scalar_lea.sflag [#allocation11], 1
    %20 = vsyncpa %s19, 0
    %21 = vsyncpa [#allocation4], 0
    %s22 = scalar_lea.sflag [#allocation4], 1
    %23 = vsyncpa %s22, 0
    loop: start=0, step=1, limit=4
    $region2: #{tpu_custom_call.1} parent=1 // loop_pre_header
      _
    $region3: #{tpu_custom_call.1} parent=1 // loop_header
      %s25 = sphi 0, %s29
      %p26 = scmp.ge.s32.totalorder %s25, 4
      %s32 = sphi 0, %s44
      %s33 = sphi 0, %s40
      %s34 = sphi 0, %s32
      %s35 = sphi 0, %s33
      %s36 = sphi 0, %s34
      %s37 = sphi 0, %s35
      %s45 = sphi 0, %s45
      %s47 = sphi 0, %s45
      %s48 = sphi 0, %s47
      %s62 = sphi 0, %s48
      %s70 = sphi 0, %s72
      %s73 = sphi 0, %s70
      %s74 = sphi 0, %s73
      %s90 = sphi 0, %s74
      %s98 = sphi 0, %s100
      %s101 = sphi 0, %s98
      %s102 = sphi 0, %s101
      %s118 = sphi 0, %s102
      %s126 = sphi 0, %s128
      %s129 = sphi 0, %s126
      %s130 = sphi 0, %s129
      %s146 = sphi 0, %s130
      %s150 = sphi 0, %s150
      %s152 = sphi 0, %s150
      %s153 = sphi 0, %s152
      %s167 = sphi 0, %s153
      %s171 = sphi 0, %s171
      %s173 = sphi 0, %s171
      %s174 = sphi 0, %s173
      %s188 = sphi 0, %s174
      %s196 = sphi 0, %s198
      %s199 = sphi 0, %s196
      %s200 = sphi 0, %s199
      %s216 = sphi 0, %s200
      %s224 = sphi 0, %s226
      %s227 = sphi 0, %s224
      %s228 = sphi 0, %s227
      %s244 = sphi 0, %s228
      %s250 = sphi 0, %s252
      %s253 = sphi 0, %s250
      %s254 = sphi 0, %s253
      %s270 = sphi 0, %s254
    $region4: #{tpu_custom_call.1} parent=1 // loop_header_branch
      %28 = sbr.rel (%p26) target = $region8
    $region5: #{tpu_custom_call.1} parent=1 // loop_body
      %s30 = ssub.s32 %s25, 1
      %s31 = ssub.s32 %s25, 2
      %s38 = sadd.s32 1, %s33
      %p39 = scmp.ge.s32.totalorder %s38, 1
      %s40 = scalar_select %p39, 0, %s38
      %s41 = sadd.s32 1, %s32
      %s42 = scalar_select %p39, %s41, %s32
      %p43 = scmp.ge.s32.totalorder %s42, 2
      %s44 = scalar_select %p43, 0, %s42
      %s46 = sadd.s32 %s45, 1
      %p49 = scmp.eq.s32.totalorder %s25, 1
      %p50 = scmp.ne.s32.totalorder %s45, %s47
      %p51 = scmp.eq.s32.totalorder %s25, 0
      %p52 = por %p50, %p51
      %p53 = scmp.ne.s32.totalorder %s45, %s47
      %p54 = scmp.eq.s32.totalorder %s30, 1
      %p55 = por %p53, %p54
      %p56 = scmp.ne.s32.totalorder %s47, %s48
      %p57 = scmp.eq.s32.totalorder %s30, 0
      %p58 = por %p56, %p57
      %p59 = scmp.ne.s32.totalorder %s47, %s48
      %p60 = scmp.eq.s32.totalorder %s31, 1
      %p61 = por %p59, %p60
      %p63 = scmp.ne.s32.totalorder %s48, %s62
      %p64 = scmp.eq.s32.totalorder %s31, 0
      %p65 = por %p63, %p64
      %s66 = sadd.s32 %s32, %s33
      %s67 = sadd.s32 %s44, %s40
      %s68 = ssub.s32 %s66, %s67
      %p69 = scmp.eq.s32.totalorder %s68, 0
      %s71 = sadd.s32 %s70, 1
      %s72 = scalar_select %p69, %s70, %s71
      %p75 = pneg %p69
      %p76 = scmp.eq.s32.totalorder %s25, 1
      %p77 = por %p75, %p76
      %p78 = scmp.ne.s32.totalorder %s70, %s73
      %p79 = scmp.eq.s32.totalorder %s25, 0
      %p80 = por %p78, %p79
      %p81 = scmp.ne.s32.totalorder %s70, %s73
      %p82 = scmp.eq.s32.totalorder %s30, 1
      %p83 = por %p81, %p82
      %p84 = scmp.ne.s32.totalorder %s73, %s74
      %p85 = scmp.eq.s32.totalorder %s30, 0
      %p86 = por %p84, %p85
      %p87 = scmp.ne.s32.totalorder %s73, %s74
      %p88 = scmp.eq.s32.totalorder %s31, 1
      %p89 = por %p87, %p88
      %p91 = scmp.ne.s32.totalorder %s74, %s90
      %p92 = scmp.eq.s32.totalorder %s31, 0
      %p93 = por %p91, %p92
      %s94 = sadd.s32 %s32, %s33
      %s95 = sadd.s32 %s44, %s40
      %s96 = ssub.s32 %s94, %s95
      %p97 = scmp.eq.s32.totalorder %s96, 0
      %s99 = sadd.s32 %s98, 1
      %s100 = scalar_select %p97, %s98, %s99
      %p103 = pneg %p97
      %p104 = scmp.eq.s32.totalorder %s25, 1
      %p105 = por %p103, %p104
      %p106 = scmp.ne.s32.totalorder %s98, %s101
      %p107 = scmp.eq.s32.totalorder %s25, 0
      %p108 = por %p106, %p107
      %p109 = scmp.ne.s32.totalorder %s98, %s101
      %p110 = scmp.eq.s32.totalorder %s30, 1
      %p111 = por %p109, %p110
      %p112 = scmp.ne.s32.totalorder %s101, %s102
      %p113 = scmp.eq.s32.totalorder %s30, 0
      %p114 = por %p112, %p113
      %p115 = scmp.ne.s32.totalorder %s101, %s102
      %p116 = scmp.eq.s32.totalorder %s31, 1
      %p117 = por %p115, %p116
      %p119 = scmp.ne.s32.totalorder %s102, %s118
      %p120 = scmp.eq.s32.totalorder %s31, 0
      %p121 = por %p119, %p120
      %s122 = sadd.s32 %s32, %s33
      %s123 = sadd.s32 %s44, %s40
      %s124 = ssub.s32 %s122, %s123
      %p125 = scmp.eq.s32.totalorder %s124, 0
      %s127 = sadd.s32 %s126, 1
      %s128 = scalar_select %p125, %s126, %s127
      %p131 = pneg %p125
      %p132 = scmp.eq.s32.totalorder %s25, 1
      %p133 = por %p131, %p132
      %p134 = scmp.ne.s32.totalorder %s126, %s129
      %p135 = scmp.eq.s32.totalorder %s25, 0
      %p136 = por %p134, %p135
      %p137 = scmp.ne.s32.totalorder %s126, %s129
      %p138 = scmp.eq.s32.totalorder %s30, 1
      %p139 = por %p137, %p138
      %p140 = scmp.ne.s32.totalorder %s129, %s130
      %p141 = scmp.eq.s32.totalorder %s30, 0
      %p142 = por %p140, %p141
      %p143 = scmp.ne.s32.totalorder %s129, %s130
      %p144 = scmp.eq.s32.totalorder %s31, 1
      %p145 = por %p143, %p144
      %p147 = scmp.ne.s32.totalorder %s130, %s146
      %p148 = scmp.eq.s32.totalorder %s31, 0
      %p149 = por %p147, %p148
      %s151 = sadd.s32 %s150, 1
      %p154 = scmp.eq.s32.totalorder %s25, 1
      %p155 = scmp.ne.s32.totalorder %s150, %s152
      %p156 = scmp.eq.s32.totalorder %s25, 0
      %p157 = por %p155, %p156
      %p158 = scmp.ne.s32.totalorder %s150, %s152
      %p159 = scmp.eq.s32.totalorder %s30, 1
      %p160 = por %p158, %p159
      %p161 = scmp.ne.s32.totalorder %s152, %s153
      %p162 = scmp.eq.s32.totalorder %s30, 0
      %p163 = por %p161, %p162
      %p164 = scmp.ne.s32.totalorder %s152, %s153
      %p165 = scmp.eq.s32.totalorder %s31, 1
      %p166 = por %p164, %p165
      %p168 = scmp.ne.s32.totalorder %s153, %s167
      %p169 = scmp.eq.s32.totalorder %s31, 0
      %p170 = por %p168, %p169
      %s172 = sadd.s32 %s171, 1
      %p175 = scmp.eq.s32.totalorder %s25, 1
      %p176 = scmp.ne.s32.totalorder %s171, %s173
      %p177 = scmp.eq.s32.totalorder %s25, 0
      %p178 = por %p176, %p177
      %p179 = scmp.ne.s32.totalorder %s171, %s173
      %p180 = scmp.eq.s32.totalorder %s30, 1
      %p181 = por %p179, %p180
      %p182 = scmp.ne.s32.totalorder %s173, %s174
      %p183 = scmp.eq.s32.totalorder %s30, 0
      %p184 = por %p182, %p183
      %p185 = scmp.ne.s32.totalorder %s173, %s174
      %p186 = scmp.eq.s32.totalorder %s31, 1
      %p187 = por %p185, %p186
      %p189 = scmp.ne.s32.totalorder %s174, %s188
      %p190 = scmp.eq.s32.totalorder %s31, 0
      %p191 = por %p189, %p190
      %s192 = sadd.s32 %s32, %s33
      %s193 = sadd.s32 %s44, %s40
      %s194 = ssub.s32 %s192, %s193
      %p195 = scmp.eq.s32.totalorder %s194, 0
      %s197 = sadd.s32 %s196, 1
      %s198 = scalar_select %p195, %s196, %s197
      %p201 = pneg %p195
      %p202 = scmp.eq.s32.totalorder %s25, 1
      %p203 = por %p201, %p202
      %p204 = scmp.ne.s32.totalorder %s196, %s199
      %p205 = scmp.eq.s32.totalorder %s25, 0
      %p206 = por %p204, %p205
      %p207 = scmp.ne.s32.totalorder %s196, %s199
      %p208 = scmp.eq.s32.totalorder %s30, 1
      %p209 = por %p207, %p208
      %p210 = scmp.ne.s32.totalorder %s199, %s200
      %p211 = scmp.eq.s32.totalorder %s30, 0
      %p212 = por %p210, %p211
      %p213 = scmp.ne.s32.totalorder %s199, %s200
      %p214 = scmp.eq.s32.totalorder %s31, 1
      %p215 = por %p213, %p214
      %p217 = scmp.ne.s32.totalorder %s200, %s216
      %p218 = scmp.eq.s32.totalorder %s31, 0
      %p219 = por %p217, %p218
      %s220 = sadd.s32 %s32, %s33
      %s221 = sadd.s32 %s44, %s40
      %s222 = ssub.s32 %s220, %s221
      %p223 = scmp.eq.s32.totalorder %s222, 0
      %s225 = sadd.s32 %s224, 1
      %s226 = scalar_select %p223, %s224, %s225
      %p229 = pneg %p223
      %p230 = scmp.eq.s32.totalorder %s25, 1
      %p231 = por %p229, %p230
      %p232 = scmp.ne.s32.totalorder %s224, %s227
      %p233 = scmp.eq.s32.totalorder %s25, 0
      %p234 = por %p232, %p233
      %p235 = scmp.ne.s32.totalorder %s224, %s227
      %p236 = scmp.eq.s32.totalorder %s30, 1
      %p237 = por %p235, %p236
      %p238 = scmp.ne.s32.totalorder %s227, %s228
      %p239 = scmp.eq.s32.totalorder %s30, 0
      %p240 = por %p238, %p239
      %p241 = scmp.ne.s32.totalorder %s227, %s228
      %p242 = scmp.eq.s32.totalorder %s31, 1
      %p243 = por %p241, %p242
      %p245 = scmp.ne.s32.totalorder %s228, %s244
      %p246 = scmp.eq.s32.totalorder %s31, 0
      %p247 = por %p245, %p246
      %s248 = ssub.s32 %s32, %s44
      %p249 = scmp.eq.s32.totalorder %s248, 0
      %s251 = sadd.s32 %s250, 1
      %s252 = scalar_select %p249, %s250, %s251
      %p255 = pneg %p249
      %p256 = scmp.eq.s32.totalorder %s25, 1
      %p257 = por %p255, %p256
      %p258 = scmp.ne.s32.totalorder %s250, %s253
      %p259 = scmp.eq.s32.totalorder %s25, 0
      %p260 = por %p258, %p259
      %p261 = scmp.ne.s32.totalorder %s250, %s253
      %p262 = scmp.eq.s32.totalorder %s30, 1
      %p263 = por %p261, %p262
      %p264 = scmp.ne.s32.totalorder %s253, %s254
      %p265 = scmp.eq.s32.totalorder %s30, 0
      %p266 = por %p264, %p265
      %p267 = scmp.ne.s32.totalorder %s253, %s254
      %p268 = scmp.eq.s32.totalorder %s31, 1
      %p269 = por %p267, %p268
      %p271 = scmp.ne.s32.totalorder %s254, %s270
      %p272 = scmp.eq.s32.totalorder %s31, 0
      %p273 = por %p271, %p272
      %p274 = scmp.le.s32.totalorder 1, %s25
      %p275 = scmp.lt.s32.totalorder %s25, 3
      %p276 = pnand %p274, %p275
      %p277 = pneg %p276
      // Predicated region
      $region9: #{tpu_custom_call.1} parent=5 // pred_check
        _
      $region10: #{tpu_custom_call.1} parent=5 // pred_check_branch
        %279 = sbr.rel (%p276) target = $region12
      $region11: #{tpu_custom_call.1} parent=5 // pred_region
        %s280 = ssub.s32 %s25, 1
        // Predicated region
        $region13: #{tpu_custom_call.1} parent=11 // pred_check
          %p281 = pneg %p58
        $region14: #{tpu_custom_call.1} parent=11 // pred_check_branch
          %283 = sbr.rel (%p281) target = $region16
        $region15: #{tpu_custom_call.1} parent=11 // pred_region
          %285 = vsyncadd [#allocation5], 0
          %s287 = sshll.u32 %s0, 4
          %s288 = int_to_ptr.vmem [resolvable:$true] %s287
          %290 = dma.vmem_to_smem %s288, 16, [#allocation2], [#allocation5]
        $region16: #{tpu_custom_call.1} parent=11 // pred_fallthru
          _
        // Predicated region
        $region17: #{tpu_custom_call.1} parent=11 // pred_check
          %p291 = pneg %p163
        $region18: #{tpu_custom_call.1} parent=11 // pred_check_branch
          %293 = sbr.rel (%p291) target = $region20
        $region19: #{tpu_custom_call.1} parent=11 // pred_region
          %295 = vsyncadd [#allocation8], 0
          %s296 = sshll.u32 %s4, 4
          %s297 = int_to_ptr.hbm [resolvable:$true] %s296
          %s298 = sshll.u32 [#allocation7], 4
          %s299 = int_to_ptr.vmem [resolvable:$true] %s298
          %304 = dma.hbm_to_vmem [thread:$0]  %s297, 2048, %s299, [#allocation8], 128, 128, 8
        $region20: #{tpu_custom_call.1} parent=11 // pred_fallthru
          _
        // Predicated region
        $region21: #{tpu_custom_call.1} parent=11 // pred_check
          %p305 = pneg %p184
        $region22: #{tpu_custom_call.1} parent=11 // pred_check_branch
          %307 = sbr.rel (%p305) target = $region24
        $region23: #{tpu_custom_call.1} parent=11 // pred_region
          %309 = vsyncadd [#allocation8], 0
          %s310 = sshll.u32 %s5, 4
          %s311 = int_to_ptr.hbm [resolvable:$true] %s310
          %s312 = sshll.u32 [#allocation9], 4
          %s313 = int_to_ptr.vmem [resolvable:$true] %s312
          %318 = dma.hbm_to_vmem [thread:$0]  %s311, 2048, %s313, [#allocation8], 128, 128, 8
        $region24: #{tpu_custom_call.1} parent=11 // pred_fallthru
          _
      $region12: #{tpu_custom_call.1} parent=5 // pred_fallthru
        _
      %p319 = scmp.lt.s32.totalorder %s25, 2
      // Predicated region
      $region25: #{tpu_custom_call.1} parent=5 // pred_check
        %p320 = pneg %p319
      $region26: #{tpu_custom_call.1} parent=5 // pred_check_branch
        %322 = sbr.rel (%p320) target = $region28
      $region27: #{tpu_custom_call.1} parent=5 // pred_region
        // Predicated region
        $region29: #{tpu_custom_call.1} parent=27 // pred_check
          %p323 = pneg %p80
        $region30: #{tpu_custom_call.1} parent=27 // pred_check_branch
          %325 = sbr.rel (%p323) target = $region32
        $region31: #{tpu_custom_call.1} parent=27 // pred_region
          %s326 = sadd.s32 %s32, %s33
          %p327 = scmp.lt.s32.totalorder %s326, 1
          %s328 = scalar_select %p327, %s326, 1
          %s329 = smul.addr %s328, 4
          %s330 = scalar_lea.vmem %s1, %s329
          %s331 = sadd.s32 %s32, %s33
        $region32: #{tpu_custom_call.1} parent=27 // pred_fallthru
          _
        // Predicated region
        $region33: #{tpu_custom_call.1} parent=27 // pred_check
          %p332 = pneg %p108
        $region34: #{tpu_custom_call.1} parent=27 // pred_check_branch
          %334 = sbr.rel (%p332) target = $region36
        $region35: #{tpu_custom_call.1} parent=27 // pred_region
          %s335 = sadd.s32 %s32, %s33
          %p336 = scmp.lt.s32.totalorder %s335, 1
          %s337 = scalar_select %p336, %s335, 1
          %s338 = smul.addr %s337, 4
          %s339 = scalar_lea.vmem %s2, %s338
          %s340 = sadd.s32 %s32, %s33
        $region36: #{tpu_custom_call.1} parent=27 // pred_fallthru
          _
        // Predicated region
        $region37: #{tpu_custom_call.1} parent=27 // pred_check
          %p341 = pneg %p136
        $region38: #{tpu_custom_call.1} parent=27 // pred_check_branch
          %343 = sbr.rel (%p341) target = $region40
        $region39: #{tpu_custom_call.1} parent=27 // pred_region
          %s344 = sand.u32 %s126, 1
          %s345 = scalar_lea.sflag [#allocation3], %s344
          %s346 = sand.u32 %s126, 1
          %s347 = smul.addr %s346, 32
          %s348 = scalar_lea.vmem [#allocation6], %s347
          %s349 = sadd.s32 %s32, %s33
          %s350 = smul.u32 8, %s349
          %352 = vsyncadd %s345, 0
          %s353 = smul.addr %s350, 4
          %s354 = scalar_lea.hbm %s3, %s353
          %s355 = sshll.u32 %s354, 4
          %s356 = int_to_ptr.hbm [resolvable:$true] %s355
          %s357 = sshll.u32 %s348, 4
          %s358 = int_to_ptr.vmem [resolvable:$true] %s357
          %363 = dma.hbm_to_vmem [thread:$0]  %s356, 512, %s358, %s345, 64, 64, 4
        $region40: #{tpu_custom_call.1} parent=27 // pred_fallthru
          _
        // Predicated region
        $region41: #{tpu_custom_call.1} parent=27 // pred_check
          %p364 = pneg %p206
        $region42: #{tpu_custom_call.1} parent=27 // pred_check_branch
          %366 = sbr.rel (%p364) target = $region44
        $region43: #{tpu_custom_call.1} parent=27 // pred_region
          %s367 = sand.u32 %s196, 1
          %s368 = scalar_lea.sflag [#allocation11], %s367
          %s369 = sand.u32 %s196, 1
          %s370 = smul.addr %s369, 4
          %s371 = scalar_lea.vmem [#allocation10], %s370
          %s372 = sadd.s32 %s32, %s33
          %374 = vsyncadd %s368, 0
          %s375 = smul.addr %s372, 4
          %s376 = scalar_lea.hbm %s6, %s375
          %s378 = sshll.u32 %s376, 4
          %s379 = int_to_ptr.hbm [resolvable:$true] %s378
          %s380 = sshll.u32 %s371, 4
          %s381 = int_to_ptr.vmem [resolvable:$true] %s380
          %383 = dma.hbm_to_vmem [thread:$0]  %s379, 64, %s381, %s368
        $region44: #{tpu_custom_call.1} parent=27 // pred_fallthru
          _
        // Predicated region
        $region45: #{tpu_custom_call.1} parent=27 // pred_check
          %p384 = pneg %p234
        $region46: #{tpu_custom_call.1} parent=27 // pred_check_branch
          %386 = sbr.rel (%p384) target = $region48
        $region47: #{tpu_custom_call.1} parent=27 // pred_region
          %s387 = sadd.s32 %s32, %s33
          %p388 = scmp.lt.s32.totalorder %s387, 1
          %s389 = scalar_select %p388, %s387, 1
          %s390 = smul.addr %s389, 8
          %s391 = scalar_lea.vmem %s7, %s390
          %s392 = sadd.s32 %s32, %s33
        $region48: #{tpu_custom_call.1} parent=27 // pred_fallthru
          _
      $region28: #{tpu_custom_call.1} parent=5 // pred_fallthru
        _
      %p393 = scmp.le.s32.totalorder 1, %s25
      %p394 = scmp.lt.s32.totalorder %s25, 3
      %p395 = pnand %p393, %p394
      %p396 = pneg %p395
      // Predicated region
      $region49: #{tpu_custom_call.1} parent=5 // pred_check
        _
      $region50: #{tpu_custom_call.1} parent=5 // pred_check_branch
        %398 = sbr.rel (%p395) target = $region52
      $region51: #{tpu_custom_call.1} parent=5 // pred_region
        %s399 = ssub.s32 %s25, 1
        // Predicated region
        $region53: #{tpu_custom_call.1} parent=51 // pred_check
          %p400 = pneg %p58
        $region54: #{tpu_custom_call.1} parent=51 // pred_check_branch
          %402 = sbr.rel (%p400) target = $region56
        $region55: #{tpu_custom_call.1} parent=51 // pred_region
          %404 = dma.done [#allocation5], 16
        $region56: #{tpu_custom_call.1} parent=51 // pred_fallthru
          _
        %s405 = sand.u32 %s129, 1
        %s406 = scalar_lea.sflag [#allocation3], %s405
        %s407 = sand.u32 %s129, 1
        %s408 = smul.addr %s407, 32
        %s409 = scalar_lea.vmem [#allocation6], %s408
        // Predicated region
        $region57: #{tpu_custom_call.1} parent=51 // pred_check
          %p410 = pneg %p142
        $region58: #{tpu_custom_call.1} parent=51 // pred_check_branch
          %412 = sbr.rel (%p410) target = $region60
        $region59: #{tpu_custom_call.1} parent=51 // pred_region
          %414 = dma.done %s406, 512
        $region60: #{tpu_custom_call.1} parent=51 // pred_fallthru
          _
        // Predicated region
        $region61: #{tpu_custom_call.1} parent=51 // pred_check
          %p415 = pneg %p163
        $region62: #{tpu_custom_call.1} parent=51 // pred_check_branch
          %417 = sbr.rel (%p415) target = $region64
        $region63: #{tpu_custom_call.1} parent=51 // pred_region
          %419 = dma.done [#allocation8], 2048
        $region64: #{tpu_custom_call.1} parent=51 // pred_fallthru
          _
        // Predicated region
        $region65: #{tpu_custom_call.1} parent=51 // pred_check
          %p420 = pneg %p184
        $region66: #{tpu_custom_call.1} parent=51 // pred_check_branch
          %422 = sbr.rel (%p420) target = $region68
        $region67: #{tpu_custom_call.1} parent=51 // pred_region
          %424 = dma.done [#allocation8], 2048
        $region68: #{tpu_custom_call.1} parent=51 // pred_fallthru
          _
        %s425 = sand.u32 %s199, 1
        %s426 = scalar_lea.sflag [#allocation11], %s425
        %s427 = sand.u32 %s199, 1
        %s428 = smul.addr %s427, 4
        %s429 = scalar_lea.vmem [#allocation10], %s428
        // Predicated region
        $region69: #{tpu_custom_call.1} parent=51 // pred_check
          %p430 = pneg %p212
        $region70: #{tpu_custom_call.1} parent=51 // pred_check_branch
          %432 = sbr.rel (%p430) target = $region72
        $region71: #{tpu_custom_call.1} parent=51 // pred_region
          %434 = dma.done %s426, 64
        $region72: #{tpu_custom_call.1} parent=51 // pred_fallthru
          _
        %435 = sfence
        %p436 = pneg %p58
        %p437 = pneg %p55
        %s438 = sadd.s32 %s34, %s35
        %p439 = scmp.lt.s32.totalorder %s438, 1
        %s440 = scalar_select %p439, %s438, 1
        %s441 = smul.addr %s440, 4
        %s442 = scalar_lea.vmem %s1, %s441
        %p443 = pneg %p86
        %p444 = pneg %p83
        %s445 = sadd.s32 %s34, %s35
        %p446 = scmp.lt.s32.totalorder %s445, 1
        %s447 = scalar_select %p446, %s445, 1
        %s448 = smul.addr %s447, 4
        %s449 = scalar_lea.vmem %s2, %s448
        %p450 = pneg %p114
        %p451 = pneg %p111
        %s452 = sand.u32 %s129, 1
        %s453 = scalar_lea.sflag [#allocation3], %s452
        %s454 = sand.u32 %s129, 1
        %s455 = smul.addr %s454, 32
        %s456 = scalar_lea.vmem [#allocation6], %s455
        %p457 = pneg %p142
        %p458 = pneg %p139
        %p459 = pneg %p163
        %p460 = pneg %p160
        %p461 = pneg %p184
        %p462 = pneg %p181
        %s463 = sand.u32 %s199, 1
        %s464 = scalar_lea.sflag [#allocation11], %s463
        %s465 = sand.u32 %s199, 1
        %s466 = smul.addr %s465, 4
        %s467 = scalar_lea.vmem [#allocation10], %s466
        %p468 = pneg %p212
        %p469 = pneg %p209
        %s470 = sadd.s32 %s34, %s35
        %p471 = scmp.lt.s32.totalorder %s470, 1
        %s472 = scalar_select %p471, %s470, 1
        %s473 = smul.addr %s472, 8
        %s474 = scalar_lea.vmem %s7, %s473
        %p475 = pneg %p240
        %p476 = pneg %p237
        %p477 = pneg %p266
        %p478 = pneg %p263
        %s479 = sand.u32 %s253, 1
        %s480 = scalar_lea.sflag [#allocation4], %s479
        %s481 = sand.u32 %s253, 1
        %s482 = scalar_lea.vmem [#allocation12], %s481
        %s483 = sadd.s32 %s34, %s35
        %p484 = scmp.lt.s32.totalorder %s483, 1
        %s485 = scalar_select %p484, %s483, 1
        %s486 = smul.addr %s485, 4
        %s487 = scalar_lea.vmem %s1, %s486
        %s488 = sadd.s32 %s34, %s35
        %s489 = sadd.s32 %s34, %s35
        %p490 = scmp.lt.s32.totalorder %s489, 1
        %s491 = scalar_select %p490, %s489, 1
        %s492 = smul.addr %s491, 4
        %s493 = scalar_lea.vmem %s2, %s492
        %s494 = sadd.s32 %s34, %s35
        %s495 = sadd.s32 %s34, %s35
        %s496 = smul.u32 8, %s495
        %s497 = sadd.s32 %s34, %s35
        %s498 = sadd.s32 %s34, %s35
        %p499 = scmp.lt.s32.totalorder %s498, 1
        %s500 = scalar_select %p499, %s498, 1
        %s501 = smul.addr %s500, 8
        %s502 = scalar_lea.vmem %s7, %s501
        %s503 = sadd.s32 %s34, %s35
        %p504 = scmp.eq.s32.totalorder %s35, 0
        // Predicated region
        $region73: #{tpu_custom_call.1} parent=51 // pred_check
          %p505 = pneg %p504
        $region74: #{tpu_custom_call.1} parent=51 // pred_check_branch
          %507 = sbr.rel (%p505) target = $region76
        $region75: #{tpu_custom_call.1} parent=51 // pred_region
          %508 = vst [vmem:[%s482] sm:$0x1] 0.0
        $region76: #{tpu_custom_call.1} parent=51 // pred_fallthru
          _
        %v509 = vld [vmem:[%s487] sm:$0xf]
        %v510 = vunpack.c.l.bf16 %v509
        %v511 = vld [vmem:[%s493] sm:$0xf]
        %v512 = vunpack.c.l.bf16 %v511
        %v513 = vld [vmem:[#allocation7] sm:$0xff]
        %v514 = vld [vmem:[#allocation7 + $0x8] sm:$0xff]
        %v515 = vld [vmem:[#allocation7 + $0x10] sm:$0xff]
        %v516 = vld [vmem:[#allocation7 + $0x18] sm:$0xff]
        %v517 = vld [vmem:[#allocation7 + $0x20] sm:$0xff]
        %v518 = vld [vmem:[#allocation7 + $0x28] sm:$0xff]
        %v519 = vld [vmem:[#allocation7 + $0x30] sm:$0xff]
        %v520 = vld [vmem:[#allocation7 + $0x38] sm:$0xff]
        %v521 = vld [vmem:[#allocation7 + $0x40] sm:$0xff]
        %v522 = vld [vmem:[#allocation7 + $0x48] sm:$0xff]
        %v523 = vld [vmem:[#allocation7 + $0x50] sm:$0xff]
        %v524 = vld [vmem:[#allocation7 + $0x58] sm:$0xff]
        %v525 = vld [vmem:[#allocation7 + $0x60] sm:$0xff]
        %v526 = vld [vmem:[#allocation7 + $0x68] sm:$0xff]
        %v527 = vld [vmem:[#allocation7 + $0x70] sm:$0xff]
        %v528 = vld [vmem:[#allocation7 + $0x78] sm:$0xff]
        %529 = vmatpush.msra.mxu0 %v528
        %530 = vmatpush.msra.mxu0 %v527
        %531 = vmatpush.msra.mxu0 %v526
        %532 = vmatpush.msra.mxu0 %v525
        %533 = vmatpush.msra.mxu0 %v524
        %534 = vmatpush.msra.mxu0 %v523
        %535 = vmatpush.msra.mxu0 %v522
        %536 = vmatpush.msra.mxu0 %v521
        %537 = vmatpush.msra.mxu0 %v520
        %538 = vmatpush.msra.mxu0 %v519
        %539 = vmatpush.msra.mxu0 %v518
        %540 = vmatpush.msra.mxu0 %v517
        %541 = vmatpush.msra.mxu0 %v516
        %542 = vmatpush.msra.mxu0 %v515
        %543 = vmatpush.msra.mxu0 %v514
        %544 = vmatpush.msra.mxu0 %v513
        %545 = vmatmul.f32.gmra.mxu0 %v510
        %v546 = vpop.f32.mrf.mxu0
        %v547 = vadd.f32 0.0, %v546
        %548 = vdwg.mxu0
        %v549 = vmul.f32 %v547, %v512
        %550 = vadd.xlane.f32.xlu0 %v549
        %v551 = vpop.xlane.xlu0 %550
        %v552 = vmax.f32 %v551, -10.0
        %v553 = vmin.f32 %v552, 10.0
        %v554 = vsub.f32 0.0, %v553
        %v555 = vmax.f32 %v554, 0.0
        %v556 = vand.u32 2147483647, %v553
        %v557 = vsub.f32 0.0, %v556
        %v558 = vmul.f32 %v557, 1.442695
        %v559 = vpow.pop %v558
        %v560 = vadd.f32 %v559, 1.0
        %v561 = vlog2.pop %v560
        %v562 = vmul.f32 %v561, 0.6931472
        %v563 = vmul.f32 -0.5, %v559
        %v564 = vadd.f32 %v563, 1.0
        %v565 = vmul.f32 %v564, %v559
        %v566 = vand.u32 2147483647, %v559
        %vm567 = vcmp.lt.f32.partialorder %v566, 0.0004427343
        %v568 = vsel %vm567, %v565, %v562
        %v569 = vadd.f32 %v555, %v568
        %v570 = vld [vmem:[%s409] sm:$0xf]
        %v571 = vunpack.c.l.bf16 %v570
        %v572 = vmul.f32 %v547, %v571
        %573 = vadd.xlane.f32.xlu0 %v572
        %v574 = vpop.xlane.xlu0 %573
        %v575 = vmax.f32 %v574, -10.0
        %v576 = vmin.f32 %v575, 10.0
        %v577 = vsub.f32 0.0, %v576
        %v578 = vsub.f32 0.0, %v577
        %v579 = vmax.f32 %v578, 0.0
        %v580 = vand.u32 2147483647, %v577
        %v581 = vsub.f32 0.0, %v580
        %v582 = vmul.f32 %v581, 1.442695
        %v583 = vpow.pop %v582
        %v584 = vadd.f32 %v583, 1.0
        %v585 = vlog2.pop %v584
        %v586 = vmul.f32 %v585, 0.6931472
        %v587 = vmul.f32 -0.5, %v583
        %v588 = vadd.f32 %v587, 1.0
        %v589 = vmul.f32 %v588, %v583
        %v590 = vand.u32 2147483647, %v583
        %vm591 = vcmp.lt.f32.partialorder %v590, 0.0004427343
        %v592 = vsel %vm591, %v589, %v586
        %v593 = vadd.f32 %v579, %v592
        %v594 = vadd.f32 %v593, 0.0
        %v595 = vld [vmem:[%s409 + $0x4] sm:$0xf]
        %v596 = vunpack.c.l.bf16 %v595
        %v597 = vmul.f32 %v547, %v596
        %598 = vadd.xlane.f32.xlu0 %v597
        %v599 = vpop.xlane.xlu0 %598
        %v600 = vmax.f32 %v599, -10.0
        %v601 = vmin.f32 %v600, 10.0
        %v602 = vsub.f32 0.0, %v601
        %v603 = vsub.f32 0.0, %v602
        %v604 = vmax.f32 %v603, 0.0
        %v605 = vand.u32 2147483647, %v602
        %v606 = vsub.f32 0.0, %v605
        %v607 = vmul.f32 %v606, 1.442695
        %v608 = vpow.pop %v607
        %v609 = vadd.f32 %v608, 1.0
        %v610 = vlog2.pop %v609
        %v611 = vmul.f32 %v610, 0.6931472
        %v612 = vmul.f32 -0.5, %v608
        %v613 = vadd.f32 %v612, 1.0
        %v614 = vmul.f32 %v613, %v608
        %v615 = vand.u32 2147483647, %v608
        %vm616 = vcmp.lt.f32.partialorder %v615, 0.0004427343
        %v617 = vsel %vm616, %v614, %v611
        %v618 = vadd.f32 %v604, %v617
        %v619 = vadd.f32 %v594, %v618
        %v620 = vld [vmem:[%s409 + $0x8] sm:$0xf]
        %v621 = vunpack.c.l.bf16 %v620
        %v622 = vmul.f32 %v547, %v621
        %623 = vadd.xlane.f32.xlu0 %v622
        %v624 = vpop.xlane.xlu0 %623
        %v625 = vmax.f32 %v624, -10.0
        %v626 = vmin.f32 %v625, 10.0
        %v627 = vsub.f32 0.0, %v626
        %v628 = vsub.f32 0.0, %v627
        %v629 = vmax.f32 %v628, 0.0
        %v630 = vand.u32 2147483647, %v627
        %v631 = vsub.f32 0.0, %v630
        %v632 = vmul.f32 %v631, 1.442695
        %v633 = vpow.pop %v632
        %v634 = vadd.f32 %v633, 1.0
        %v635 = vlog2.pop %v634
        %v636 = vmul.f32 %v635, 0.6931472
        %v637 = vmul.f32 -0.5, %v633
        %v638 = vadd.f32 %v637, 1.0
        %v639 = vmul.f32 %v638, %v633
        %v640 = vand.u32 2147483647, %v633
        %vm641 = vcmp.lt.f32.partialorder %v640, 0.0004427343
        %v642 = vsel %vm641, %v639, %v636
        %v643 = vadd.f32 %v629, %v642
        %v644 = vadd.f32 %v619, %v643
        %v645 = vld [vmem:[%s409 + $0xc] sm:$0xf]
        %v646 = vunpack.c.l.bf16 %v645
        %v647 = vmul.f32 %v547, %v646
        %648 = vadd.xlane.f32.xlu0 %v647
        %v649 = vpop.xlane.xlu0 %648
        %v650 = vmax.f32 %v649, -10.0
        %v651 = vmin.f32 %v650, 10.0
        %v652 = vsub.f32 0.0, %v651
        %v653 = vsub.f32 0.0, %v652
        %v654 = vmax.f32 %v653, 0.0
        %v655 = vand.u32 2147483647, %v652
        %v656 = vsub.f32 0.0, %v655
        %v657 = vmul.f32 %v656, 1.442695
        %v658 = vpow.pop %v657
        %v659 = vadd.f32 %v658, 1.0
        %v660 = vlog2.pop %v659
        %v661 = vmul.f32 %v660, 0.6931472
        %v662 = vmul.f32 -0.5, %v658
        %v663 = vadd.f32 %v662, 1.0
        %v664 = vmul.f32 %v663, %v658
        %v665 = vand.u32 2147483647, %v658
        %vm666 = vcmp.lt.f32.partialorder %v665, 0.0004427343
        %v667 = vsel %vm666, %v664, %v661
        %v668 = vadd.f32 %v654, %v667
        %v669 = vadd.f32 %v644, %v668
        %v670 = vld [vmem:[%s409 + $0x10] sm:$0xf]
        %v671 = vunpack.c.l.bf16 %v670
        %v672 = vmul.f32 %v547, %v671
        %673 = vadd.xlane.f32.xlu0 %v672
        %v674 = vpop.xlane.xlu0 %673
        %v675 = vmax.f32 %v674, -10.0
        %v676 = vmin.f32 %v675, 10.0
        %v677 = vsub.f32 0.0, %v676
        %v678 = vsub.f32 0.0, %v677
        %v679 = vmax.f32 %v678, 0.0
        %v680 = vand.u32 2147483647, %v677
        %v681 = vsub.f32 0.0, %v680
        %v682 = vmul.f32 %v681, 1.442695
        %v683 = vpow.pop %v682
        %v684 = vadd.f32 %v683, 1.0
        %v685 = vlog2.pop %v684
        %v686 = vmul.f32 %v685, 0.6931472
        %v687 = vmul.f32 -0.5, %v683
        %v688 = vadd.f32 %v687, 1.0
        %v689 = vmul.f32 %v688, %v683
        %v690 = vand.u32 2147483647, %v683
        %vm691 = vcmp.lt.f32.partialorder %v690, 0.0004427343
        %v692 = vsel %vm691, %v689, %v686
        %v693 = vadd.f32 %v679, %v692
        %v694 = vadd.f32 %v669, %v693
        %v695 = vld [vmem:[%s409 + $0x14] sm:$0xf]
        %v696 = vunpack.c.l.bf16 %v695
        %v697 = vmul.f32 %v547, %v696
        %698 = vadd.xlane.f32.xlu0 %v697
        %v699 = vpop.xlane.xlu0 %698
        %v700 = vmax.f32 %v699, -10.0
        %v701 = vmin.f32 %v700, 10.0
        %v702 = vsub.f32 0.0, %v701
        %v703 = vsub.f32 0.0, %v702
        %v704 = vmax.f32 %v703, 0.0
        %v705 = vand.u32 2147483647, %v702
        %v706 = vsub.f32 0.0, %v705
        %v707 = vmul.f32 %v706, 1.442695
        %v708 = vpow.pop %v707
        %v709 = vadd.f32 %v708, 1.0
        %v710 = vlog2.pop %v709
        %v711 = vmul.f32 %v710, 0.6931472
        %v712 = vmul.f32 -0.5, %v708
        %v713 = vadd.f32 %v712, 1.0
        %v714 = vmul.f32 %v713, %v708
        %v715 = vand.u32 2147483647, %v708
        %vm716 = vcmp.lt.f32.partialorder %v715, 0.0004427343
        %v717 = vsel %vm716, %v714, %v711
        %v718 = vadd.f32 %v704, %v717
        %v719 = vadd.f32 %v694, %v718
        %v720 = vld [vmem:[%s409 + $0x18] sm:$0xf]
        %v721 = vunpack.c.l.bf16 %v720
        %v722 = vmul.f32 %v547, %v721
        %723 = vadd.xlane.f32.xlu0 %v722
        %v724 = vpop.xlane.xlu0 %723
        %v725 = vmax.f32 %v724, -10.0
        %v726 = vmin.f32 %v725, 10.0
        %v727 = vsub.f32 0.0, %v726
        %v728 = vsub.f32 0.0, %v727
        %v729 = vmax.f32 %v728, 0.0
        %v730 = vand.u32 2147483647, %v727
        %v731 = vsub.f32 0.0, %v730
        %v732 = vmul.f32 %v731, 1.442695
        %v733 = vpow.pop %v732
        %v734 = vadd.f32 %v733, 1.0
        %v735 = vlog2.pop %v734
        %v736 = vmul.f32 %v735, 0.6931472
        %v737 = vmul.f32 -0.5, %v733
        %v738 = vadd.f32 %v737, 1.0
        %v739 = vmul.f32 %v738, %v733
        %v740 = vand.u32 2147483647, %v733
        %vm741 = vcmp.lt.f32.partialorder %v740, 0.0004427343
        %v742 = vsel %vm741, %v739, %v736
        %v743 = vadd.f32 %v729, %v742
        %v744 = vadd.f32 %v719, %v743
        %v745 = vld [vmem:[%s409 + $0x1c] sm:$0xf]
        %v746 = vunpack.c.l.bf16 %v745
        %v747 = vmul.f32 %v547, %v746
        %748 = vadd.xlane.f32.xlu0 %v747
        %v749 = vpop.xlane.xlu0 %748
        %v750 = vmax.f32 %v749, -10.0
        %v751 = vmin.f32 %v750, 10.0
        %v752 = vsub.f32 0.0, %v751
        %v753 = vsub.f32 0.0, %v752
        %v754 = vmax.f32 %v753, 0.0
        %v755 = vand.u32 2147483647, %v752
        %v756 = vsub.f32 0.0, %v755
        %v757 = vmul.f32 %v756, 1.442695
        %v758 = vpow.pop %v757
        %v759 = vadd.f32 %v758, 1.0
        %v760 = vlog2.pop %v759
        %v761 = vmul.f32 %v760, 0.6931472
        %v762 = vmul.f32 -0.5, %v758
        %v763 = vadd.f32 %v762, 1.0
        %v764 = vmul.f32 %v763, %v758
        %v765 = vand.u32 2147483647, %v758
        %vm766 = vcmp.lt.f32.partialorder %v765, 0.0004427343
        %v767 = vsel %vm766, %v764, %v761
        %v768 = vadd.f32 %v754, %v767
        %v769 = vadd.f32 %v744, %v768
        %v770 = vld [vmem:[#allocation9] sm:$0xff]
        %v771 = vld [vmem:[#allocation9 + $0x8] sm:$0xff]
        %v772 = vld [vmem:[#allocation9 + $0x10] sm:$0xff]
        %v773 = vld [vmem:[#allocation9 + $0x18] sm:$0xff]
        %v774 = vld [vmem:[#allocation9 + $0x20] sm:$0xff]
        %v775 = vld [vmem:[#allocation9 + $0x28] sm:$0xff]
        %v776 = vld [vmem:[#allocation9 + $0x30] sm:$0xff]
        %v777 = vld [vmem:[#allocation9 + $0x38] sm:$0xff]
        %v778 = vld [vmem:[#allocation9 + $0x40] sm:$0xff]
        %v779 = vld [vmem:[#allocation9 + $0x48] sm:$0xff]
        %v780 = vld [vmem:[#allocation9 + $0x50] sm:$0xff]
        %v781 = vld [vmem:[#allocation9 + $0x58] sm:$0xff]
        %v782 = vld [vmem:[#allocation9 + $0x60] sm:$0xff]
        %v783 = vld [vmem:[#allocation9 + $0x68] sm:$0xff]
        %v784 = vld [vmem:[#allocation9 + $0x70] sm:$0xff]
        %v785 = vld [vmem:[#allocation9 + $0x78] sm:$0xff]
        %786 = vmatpush.msra.mxu0 %v785
        %787 = vmatpush.msra.mxu0 %v784
        %788 = vmatpush.msra.mxu0 %v783
        %789 = vmatpush.msra.mxu0 %v782
        %790 = vmatpush.msra.mxu0 %v781
        %791 = vmatpush.msra.mxu0 %v780
        %792 = vmatpush.msra.mxu0 %v779
        %793 = vmatpush.msra.mxu0 %v778
        %794 = vmatpush.msra.mxu0 %v777
        %795 = vmatpush.msra.mxu0 %v776
        %796 = vmatpush.msra.mxu0 %v775
        %797 = vmatpush.msra.mxu0 %v774
        %798 = vmatpush.msra.mxu0 %v773
        %799 = vmatpush.msra.mxu0 %v772
        %800 = vmatpush.msra.mxu0 %v771
        %801 = vmatpush.msra.mxu0 %v770
        %802 = vmatmul.f32.gmra.mxu0 %v510
        %v803 = vpop.f32.mrf.mxu0
        %v804 = vadd.f32 0.0, %v803
        %805 = vdwg.mxu0
        %v806 = vld [vmem:[%s429] sm:$0xf]
        %v807 = vunpack.c.l.bf16 %v806
        %v808 = vmax.f32 %v804, 0.0
        %v809 = vmul.f32 %v804, %v807
        %v810 = vsub.f32 %v808, %v809
        %v811 = vand.u32 2147483647, %v804
        %v812 = vsub.f32 0.0, %v811
        %v813 = vmul.f32 %v812, 1.442695
        %v814 = vpow.pop %v813
        %v815 = vadd.f32 %v814, 1.0
        %v816 = vlog2.pop %v815
        %v817 = vmul.f32 %v816, 0.6931472
        %v818 = vmul.f32 -0.5, %v814
        %v819 = vadd.f32 %v818, 1.0
        %v820 = vmul.f32 %v819, %v814
        %v821 = vand.u32 2147483647, %v814
        %vm822 = vcmp.lt.f32.partialorder %v821, 0.0004427343
        %v823 = vsel %vm822, %v820, %v817
        %v824 = vadd.f32 %v810, %v823
        %825 = vadd.xlane.f32.xlu0 %v824
        %v826 = vpop.xlane.xlu0 %825
        %v827 = vsub.f32 %v826, 5.5451775
        %v828 = vld [vmem:[%s502] sm:$0xff]
        %v829 = vmul.f32 %v827, %v828
        %vm830 = vcmask 7168
        %v831 = vsel %vm830, %v829, 0.0
        %832 = vadd.xlane.f32.xlu0 %v831
        %v833 = vpop.xlane.xlu0 %832
        %v834 = vrot.slane %v833, 4
        %v835 = vadd.f32 %v833, %v834
        %v836 = vrot.slane %v835, 2
        %v837 = vadd.f32 %v835, %v836
        %v838 = vrot.slane %v837, 1
        %v839 = vadd.f32 %v837, %v838
        %s840 = vtos %v839
        %s841 = sld [smem:[#allocation2]]
        %s842 = sld [smem:[#allocation2 + $0x1]]
        %v843 = vadd.f32 %v569, %v769
        %v844 = vsel %vm830, %v843, 0.0
        %845 = vadd.xlane.f32.xlu0 %v844
        %v846 = vpop.xlane.xlu0 %845
        %v847 = vrot.slane %v846, 4
        %v848 = vadd.f32 %v846, %v847
        %v849 = vrot.slane %v848, 2
        %v850 = vadd.f32 %v848, %v849
        %v851 = vrot.slane %v850, 1
        %v852 = vadd.f32 %v850, %v851
        %s853 = vtos %v852
        %s854 = smul.f32 %s853, %s841
        %s855 = smul.f32 %s840, %s842
        %s856 = sadd.f32 %s854, %s855
        %v857 = vld [vmem:[%s482] sm:$0x1]
        %v858 = vstv %s856
        %v859 = vadd.f32 %v857, %v858
        %860 = vst [vmem:[%s482] sm:$0x1] %v859
        %s861 = sand.u32 %s253, 1
        %s862 = scalar_lea.sflag [#allocation4], %s861
        %s863 = sand.u32 %s253, 1
        %s864 = scalar_lea.vmem [#allocation12], %s863
        // Predicated region
        $region77: #{tpu_custom_call.1} parent=51 // pred_check
          %p865 = pneg %p263
        $region78: #{tpu_custom_call.1} parent=51 // pred_check_branch
          %867 = sbr.rel (%p865) target = $region80
        $region79: #{tpu_custom_call.1} parent=51 // pred_region
          %869 = vsyncadd %s862, 0
          %s870 = scalar_lea.hbm %s8, %s34
          %s872 = sshll.u32 %s864, 4
          %s873 = int_to_ptr.vmem [resolvable:$true] %s872
          %s874 = sshll.u32 %s870, 4
          %s875 = int_to_ptr.hbm [resolvable:$true] %s874
          %877 = dma.vmem_to_hbm [thread:$0]  %s873, 16, %s875, %s862
        $region80: #{tpu_custom_call.1} parent=51 // pred_fallthru
          _
      $region52: #{tpu_custom_call.1} parent=5 // pred_fallthru
        _
      %p878 = scmp.le.s32.totalorder 2, %s25
      // Predicated region
      $region81: #{tpu_custom_call.1} parent=5 // pred_check
        %p879 = pneg %p878
      $region82: #{tpu_custom_call.1} parent=5 // pred_check_branch
        %881 = sbr.rel (%p879) target = $region84
      $region83: #{tpu_custom_call.1} parent=5 // pred_region
        %s882 = ssub.s32 %s25, 2
        // Predicated region
        $region85: #{tpu_custom_call.1} parent=83 // pred_check
          %p883 = pneg %p269
        $region86: #{tpu_custom_call.1} parent=83 // pred_check_branch
          %885 = sbr.rel (%p883) target = $region88
        $region87: #{tpu_custom_call.1} parent=83 // pred_region
          %s886 = sand.u32 %s254, 1
          %s887 = scalar_lea.sflag [#allocation4], %s886
          %s888 = sand.u32 %s254, 1
          %s889 = scalar_lea.vmem [#allocation12], %s888
          %891 = dma.done %s887, 16
        $region88: #{tpu_custom_call.1} parent=83 // pred_fallthru
          _
      $region84: #{tpu_custom_call.1} parent=5 // pred_fallthru
        _
    $region6: #{tpu_custom_call.1} parent=1 // loop_footer
      %s29 = sadd.s32 1, %s25
    $region7: #{tpu_custom_call.1} parent=1 // loop_footer_branch
      %24 = sbr.rel target = $region3
    $region8: #{tpu_custom_call.1} parent=1 // loop_exit
      _
    %892 = vsyncpa [#allocation3], 1
    %s893 = scalar_lea.sflag [#allocation3], 1
    %894 = vsyncpa %s893, 1
    %895 = vsyncpa [#allocation8], 1
    %896 = vsyncpa [#allocation11], 1
    %s897 = scalar_lea.sflag [#allocation11], 1
    %898 = vsyncpa %s897, 1
    %899 = vsyncpa [#allocation4], 1
    %s900 = scalar_lea.sflag [#allocation4], 1
    %901 = vsyncpa %s900, 1
    %902 = vsyncpa [#allocation5], 1
    %s903 = scalar_lea.sflag [#allocation5], 1
    %904 = vsyncpa %s903, 1

</llo_original>
